<compile_context>
chip_gen: v5e
topology: v5e:2x2
jax: 0.10.0
libtpu: 0.0.40
codegen_flags: <defaults>
</compile_context>

<pallas_src>
import numpy as np
import jax
import jax.numpy as jnp
from jax import lax
from jax.experimental import pallas as pl
from jax.experimental.pallas import tpu as pltpu


LANE = 128       # TPU lane width (last dim)
SUB_BF16 = 16    # bf16 sublane packing (second-minor dim)


def _round_up(x, m):
    return ((x + m - 1) // m) * m


def _pick_divisor_tile(p, candidates, prefer_multi=False):
    """Pick a tile size from `candidates` (descending) that divides p.
    If prefer_multi, first try to also leave >= 2 blocks along that axis."""
    if prefer_multi:
        for c in candidates:
            if p % c == 0 and p // c >= 2:
                return c
    for c in candidates:
        if p % c == 0:
            return c
    return p


# ----------------------------- Pallas kernels ------------------------------

def _mm_bias_kernel(a_ref, b_ref, bias_ref, o_ref):
    # Single K-step: no accumulator scratch, fused bias epilogue.
    o_ref[...] = (jnp.dot(a_ref[...], b_ref[...],
                          preferred_element_type=jnp.float32)
                  + bias_ref[...]).astype(o_ref.dtype)


def _mm_bias_acc_kernel(a_ref, b_ref, bias_ref, o_ref, acc_ref):
    # Multi K-step: f32 VMEM accumulator, bias fused into final write.
    @pl.when(pl.program_id(2) == 0)
    def _init():
        acc_ref[...] = jnp.zeros_like(acc_ref)

    acc_ref[...] += jnp.dot(a_ref[...], b_ref[...],
                            preferred_element_type=jnp.float32)

    @pl.when(pl.program_id(2) == pl.num_programs(2) - 1)
    def _fin():
        o_ref[...] = (acc_ref[...] + bias_ref[...]).astype(o_ref.dtype)


def pallas_linear(x, lin):
    """y = x @ W + b.  x: (M, K) f32.  W pre-laid as (Kp, Np) bf16 slab."""
    M, K = x.shape
    assert K == lin['K']
    Kp, Np, N = lin['Kp'], lin['Np'], lin['N']

    # Pad activations (M -> mult of 16 for bf16 sublanes, K -> Kp=mult of 128)
    # and cast to bf16 only at the MXU boundary.
    Mp = _round_up(max(M, 1), SUB_BF16)
    xp = jnp.zeros((Mp, Kp), jnp.bfloat16).at[:M, :K].set(
        x.astype(jnp.bfloat16))

    # Tile choices.  Kp is only padded to 128; tk divides Kp exactly.
    tm = _pick_divisor_tile(Mp, (1024, 512, 256, 128, 64, 32, 16))
    tn = _pick_divisor_tile(Np, (512, 384, 256, 128), prefer_multi=True)
    tk = Kp if Kp <= 2048 else _pick_divisor_tile(
        Kp, (2048, 1024, 512, 256, 128))

    gm, gn, gk = Mp // tm, Np // tn, Kp // tk

    if gk == 1:
        out = pl.pallas_call(
            _mm_bias_kernel,
            out_shape=jax.ShapeDtypeStruct((Mp, Np), jnp.float32),
            grid=(gm, gn),
            in_specs=[pl.BlockSpec((tm, Kp), lambda i, j: (i, 0)),
                      pl.BlockSpec((Kp, tn), lambda i, j: (0, j)),
                      pl.BlockSpec((1, tn), lambda i, j: (0, j))],
            out_specs=pl.BlockSpec((tm, tn), lambda i, j: (i, j)),
            compiler_params=pltpu.CompilerParams(
                dimension_semantics=("parallel", "parallel")),
        )(xp, lin['w_p'], lin['b_p'])
    else:
        out = pl.pallas_call(
            _mm_bias_acc_kernel,
            out_shape=jax.ShapeDtypeStruct((Mp, Np), jnp.float32),
            grid=(gm, gn, gk),
            in_specs=[pl.BlockSpec((tm, tk), lambda i, j, k: (i, k)),
                      pl.BlockSpec((tk, tn), lambda i, j, k: (k, j)),
                      pl.BlockSpec((1, tn), lambda i, j, k: (0, j))],
            out_specs=pl.BlockSpec((tm, tn), lambda i, j, k: (i, j)),
            scratch_shapes=[pltpu.VMEM((tm, tn), jnp.float32)],
            compiler_params=pltpu.CompilerParams(
                dimension_semantics=("parallel", "parallel", "arbitrary")),
        )(xp, lin['w_p'], lin['b_p'])

    return out[:M, :N]


# ------------------------------- NN pieces ---------------------------------

def make_linear(key, K, N):
    """Linear layer with weights pre-padded/pre-laid for the Pallas matmul."""
    kw, kb = jax.random.split(key)
    bound = float(np.sqrt(1.0 / K))          # PyTorch nn.Linear default init
    w = jax.random.uniform(kw, (K, N), jnp.float32, -bound, bound)
    b = jax.random.uniform(kb, (N,), jnp.float32, -bound, bound)
    Kp, Np = _round_up(K, LANE), _round_up(N, LANE)
    w_p = jnp.zeros((Kp, Np), jnp.bfloat16).at[:K, :N].set(
        w.astype(jnp.bfloat16))
    b_p = jnp.zeros((1, Np), jnp.float32).at[0, :N].set(b)
    return {'w_p': w_p, 'b_p': b_p, 'K': K, 'N': N, 'Kp': Kp, 'Np': Np}


def init_mlp(key, sizes):
    keys = jax.random.split(key, len(sizes) - 1)
    layers = []
    for i in range(len(sizes) - 1):
        lin = make_linear(keys[i], sizes[i], sizes[i + 1])
        lin['g'] = jnp.ones((sizes[i + 1],), jnp.float32)     # BN gamma
        lin['beta'] = jnp.zeros((sizes[i + 1],), jnp.float32)  # BN beta
        layers.append(lin)
    return layers


def batchnorm1d(h, g, b, eps=1e-5):
    # Training-mode batch statistics (biased variance), matches nn.BatchNorm1d.
    mean = h.mean(0, keepdims=True)
    var = ((h - mean) ** 2).mean(0, keepdims=True)
    return (h - mean) * lax.rsqrt(var + eps) * g[None, :] + b[None, :]


# TODO(synk): ut.buildNetworkv5 source unavailable; hidden-layer order assumed
#             Linear -> BatchNorm1d -> Dropout -> LeakyReLU, final plain Linear.
def mlp_forward(layers, x, key, dropout, train=True):
    h = x
    n = len(layers)
    dkeys = jax.random.split(key, n)
    for i, lyr in enumerate(layers):
        h = pallas_linear(h, lyr)
        if i < n - 1:
            h = batchnorm1d(h, lyr['g'], lyr['beta'])
            if train and dropout > 0:
                keep = jax.random.bernoulli(dkeys[i], 1.0 - dropout, h.shape)
                h = jnp.where(keep, h / (1.0 - dropout), 0.0)
            h = jax.nn.leaky_relu(h, 0.01)
    return h


# ------------------------------ math helpers -------------------------------

def softclip(t, lo, hi):
    # TODO(synk): exact ut.softclip formula unavailable; smooth two-sided clip.
    return lo + jax.nn.softplus(t - lo) - jax.nn.softplus(t - hi)


# --------------------------- parameters / forward ---------------------------

def init_params(key, cfg):
    nx, nh, nz, numhidden = cfg['nx'], cfg['nh'], cfg['nz'], cfg['numhidden']
    kq, kp = jax.random.split(key)
    return {
        'logsigma_x': jnp.zeros((nx,), jnp.float32),
        'Qz': init_mlp(kq, [nx] + numhidden * [nh] + [nz]),
        'Px': init_mlp(kp, [nz] + numhidden * [nh] + [nx]),
    }


def forward(params, cfg, x_in, key, y=None):
    B = x_in.shape[0]
    x = x_in.reshape(B, -1)                                   # nn.Flatten()
    kqz, kpx = jax.random.split(key)

    z = mlp_forward(params['Qz'], x, kqz, cfg['dropout'])     # encoder
    rec = mlp_forward(params['Px'], z, kpx, cfg['dropout'])   # decoder

    losses = {}
    output = {'z': z}

    if cfg['reclosstype'] == 'Bernoulli':
        logits = rec
        rec = jax.nn.sigmoid(logits)
        bce = (jnp.maximum(logits, 0.0) - logits * x
               + jnp.log1p(jnp.exp(-jnp.abs(logits))))
        loss_rec = bce.sum(-1).mean()
    else:  # 'Gauss' (default)
        logsigma_x = softclip(params['logsigma_x'], -7.0, 7.0)    # (nx,)
        inv_var = jnp.exp(-2.0 * logsigma_x)
        diff = x - rec
        logprob = (-0.5 * diff * diff * inv_var[None, :]
                   - logsigma_x[None, :]
                   - 0.5 * jnp.log(2.0 * jnp.pi))
        loss_rec = -logprob.sum(-1).mean()

    output['rec'] = rec
    losses['rec'] = loss_rec
    losses['total_loss'] = 1.0 * (loss_rec + 0.0)
    output['losses'] = losses
    return output


# ----------------------------------- main ------------------------------------

if __name__ == "__main__":
    cfg = dict(nx=28 * 28, nh=1024, nz=64, numhidden=2, dropout=0.2,
               reclosstype='Gauss')
    key = jax.random.PRNGKey(0)
    pkey, xkey, fkey = jax.random.split(key, 3)
    params = init_params(pkey, cfg)
    x = jax.random.uniform(xkey, (2, 1, 28, 28), jnp.float32)
    out = forward(params, cfg, x, fkey)
    jax.block_until_ready(out['losses']['total_loss'])
    print("KERNEL_OK")
</pallas_src>

<mosaic_0001>
module attributes {stable_mosaic.version = 11 : i64} {
  func.func @_mm_bias_kernel(%arg0: i32, %arg1: i32, %arg2: memref<16x896xbf16, #tpu.memory_space<vmem>>, %arg3: memref<896x512xbf16, #tpu.memory_space<vmem>>, %arg4: memref<1x512xf32, #tpu.memory_space<vmem>>, %arg5: memref<16x512xf32, #tpu.memory_space<vmem>>) attributes {dimension_semantics = [#tpu.dimension_semantics<parallel>, #tpu.dimension_semantics<parallel>], iteration_bounds = array<i64: 1, 2>, scalar_prefetch = 0 : i64, scratch_operands = 0 : i64, tpu.core_type = #tpu.core_type<tc>, window_params = [{transform_indices = @transform_0, window_bounds = array<i64: 16, 896>}, {transform_indices = @transform_1, window_bounds = array<i64: 896, 512>}, {transform_indices = @transform_2, window_bounds = array<i64: 1, 512>}, {transform_indices = @transform_3, window_bounds = array<i64: 16, 512>}]} {
    %c0 = arith.constant 0 : index
    %c0_0 = arith.constant 0 : index
    %0 = vector.load %arg2[%c0, %c0_0] : memref<16x896xbf16, #tpu.memory_space<vmem>>, vector<16x896xbf16>
    %c0_1 = arith.constant 0 : index
    %c0_2 = arith.constant 0 : index
    %1 = vector.load %arg3[%c0_1, %c0_2] : memref<896x512xbf16, #tpu.memory_space<vmem>>, vector<896x512xbf16>
    %cst = arith.constant dense<0.000000e+00> : vector<16x512xf32>
    %2 = tpu.matmul %0, %1, %cst {dimension_numbers = #tpu.dot_dimension_numbers<[1], [0], [0], [1], [0, 0, 1, 1], [], []>} : vector<16x896xbf16>, vector<896x512xbf16>, vector<16x512xf32> -> vector<16x512xf32>
    %c0_3 = arith.constant 0 : index
    %c0_4 = arith.constant 0 : index
    %3 = vector.load %arg4[%c0_3, %c0_4] : memref<1x512xf32, #tpu.memory_space<vmem>>, vector<1x512xf32>
    %4 = vector.broadcast %3 : vector<1x512xf32> to vector<16x512xf32>
    %5 = arith.addf %2, %4 : vector<16x512xf32>
    %c0_5 = arith.constant 0 : index
    %c0_6 = arith.constant 0 : index
    %6 = vector.load %arg5[%c0_5, %c0_6] : memref<16x512xf32, #tpu.memory_space<vmem>>, vector<16x512xf32>
    tpu.vector_store %arg5[%c0_5, %c0_6], %5 {strides = array<i32>} : memref<16x512xf32, #tpu.memory_space<vmem>>, vector<16x512xf32>,
    return
  }
  func.func @transform_0(%arg0: i32, %arg1: i32) -> (i32, i32) {
    %c0_i32 = arith.constant 0 : i32
    %c0_i32_0 = arith.constant 0 : i32
    return %arg0, %c0_i32 : i32, i32
  }
  func.func @transform_1(%arg0: i32, %arg1: i32) -> (i32, i32) {
    %c0_i32 = arith.constant 0 : i32
    %c0_i32_0 = arith.constant 0 : i32
    return %c0_i32, %arg1 : i32, i32
  }
  func.func @transform_2(%arg0: i32, %arg1: i32) -> (i32, i32) {
    %c0_i32 = arith.constant 0 : i32
    %c0_i32_0 = arith.constant 0 : i32
    return %c0_i32, %arg1 : i32, i32
  }
  func.func @transform_3(%arg0: i32, %arg1: i32) -> (i32, i32) {
    %c0_i32 = arith.constant 0 : i32
    return %arg0, %arg1 : i32, i32
  }
}

</mosaic_0001>

<llo_original>
// kernel: tpu_custom_call.1
$region0: #{tpu_custom_call.1}
  #allocation0 [shape = 'u32[]', space=smem, size = 0x4, offset = 0x4, fixed_abs, tag = 'smem constant byte address 0x4 - core index']
  #allocation1 [shape = 'u32[72,128]{1,0:T(1,128)}', space=vmem, size = 0x9000, scoped, tag = 'internal scratch']
  %s0 = inlined_call_operand.hbm [shape: bf16[16,896], index: 0, kind: input, shape index: {}]
  %s1 = inlined_call_operand.hbm [shape: bf16[896,1024], index: 1, kind: input, shape index: {}]
  %s2 = inlined_call_operand.hbm [shape: f32[1,1024], index: 2, kind: input, shape index: {}]
  %s3 = inlined_call_operand.hbm [shape: f32[16,1024], index: 3, kind: output, shape index: {}]
  %s4 = sld [smem:[#allocation0]]
  $region57: #{tpu_custom_call.1} parent=0
    _
  %s6 = ssub.s32 1, %s4
  %s7 = scalar_select 0, %s6, %s4
  $region1: #{tpu_custom_call.1} parent=0
    #allocation2 [shape = 'u8[28672]{0}', space=vmem, size = 0x7000, scoped, tag = 'input window, operand 0, single buffered']
    #allocation3 [shape = 's32[2]{0}', space=sflag, size = 0x8, scoped, tag = 'scoped memory for tpu_custom_call.1']
    #allocation4 [shape = 's32[2]{0}', space=sflag, size = 0x8, scoped, tag = 'scoped memory for tpu_custom_call.1']
    #allocation5 [shape = 'u8[1835008]{0}', space=vmem, size = 0x1c0000, scoped, tag = 'input window, operand 1']
    #allocation6 [shape = 's32[2]{0}', space=sflag, size = 0x8, scoped, tag = 'scoped memory for tpu_custom_call.1']
    #allocation7 [shape = 'u8[4096]{0}', space=vmem, size = 0x1000, scoped, tag = 'input window, operand 2']
    #allocation8 [shape = 'u8[65536]{0}', space=vmem, size = 0x10000, scoped, tag = 'output window, operand 0']
    %8 = vsyncpa [#allocation3], 0
    %9 = vsyncpa [#allocation6], 0
    %s10 = scalar_lea.sflag [#allocation6], 1
    %11 = vsyncpa %s10, 0
    %12 = vsyncpa [#allocation4], 0
    %s13 = scalar_lea.sflag [#allocation4], 1
    %14 = vsyncpa %s13, 0
    loop: start=0, step=1, limit=4
    $region2: #{tpu_custom_call.1} parent=1 // loop_pre_header
      _
    $region3: #{tpu_custom_call.1} parent=1 // loop_header
      %s16 = sphi 0, %s20
      %p17 = scmp.ge.s32.totalorder %s16, 4
      %s23 = sphi 0, %s35
      %s24 = sphi 0, %s31
      %s25 = sphi 0, %s23
      %s26 = sphi 0, %s24
      %s27 = sphi 0, %s25
      %s28 = sphi 0, %s26
      %s38 = sphi 0, %s40
      %s41 = sphi 0, %s38
      %s42 = sphi 0, %s41
      %s58 = sphi 0, %s42
      %s64 = sphi 0, %s66
      %s67 = sphi 0, %s64
      %s68 = sphi 0, %s67
      %s84 = sphi 0, %s68
      %s90 = sphi 0, %s92
      %s93 = sphi 0, %s90
      %s94 = sphi 0, %s93
      %s110 = sphi 0, %s94
      %s118 = sphi 0, %s120
      %s121 = sphi 0, %s118
      %s122 = sphi 0, %s121
      %s138 = sphi 0, %s122
    $region4: #{tpu_custom_call.1} parent=1 // loop_header_branch
      %19 = sbr.rel (%p17) target = $region8
    $region5: #{tpu_custom_call.1} parent=1 // loop_body
      %s21 = ssub.s32 %s16, 1
      %s22 = ssub.s32 %s16, 2
      %s29 = sadd.s32 1, %s24
      %p30 = scmp.ge.s32.totalorder %s29, 2
      %s31 = scalar_select %p30, 0, %s29
      %s32 = sadd.s32 1, %s23
      %s33 = scalar_select %p30, %s32, %s23
      %p34 = scmp.ge.s32.totalorder %s33, 1
      %s35 = scalar_select %p34, 0, %s33
      %s36 = ssub.s32 %s23, %s35
      %p37 = scmp.eq.s32.totalorder %s36, 0
      %s39 = sadd.s32 %s38, 1
      %s40 = scalar_select %p37, %s38, %s39
      %p43 = pneg %p37
      %p44 = scmp.eq.s32.totalorder %s16, 1
      %p45 = por %p43, %p44
      %p46 = scmp.ne.s32.totalorder %s38, %s41
      %p47 = scmp.eq.s32.totalorder %s16, 0
      %p48 = por %p46, %p47
      %p49 = scmp.ne.s32.totalorder %s38, %s41
      %p50 = scmp.eq.s32.totalorder %s21, 1
      %p51 = por %p49, %p50
      %p52 = scmp.ne.s32.totalorder %s41, %s42
      %p53 = scmp.eq.s32.totalorder %s21, 0
      %p54 = por %p52, %p53
      %p55 = scmp.ne.s32.totalorder %s41, %s42
      %p56 = scmp.eq.s32.totalorder %s22, 1
      %p57 = por %p55, %p56
      %p59 = scmp.ne.s32.totalorder %s42, %s58
      %p60 = scmp.eq.s32.totalorder %s22, 0
      %p61 = por %p59, %p60
      %s62 = ssub.s32 %s24, %s31
      %p63 = scmp.eq.s32.totalorder %s62, 0
      %s65 = sadd.s32 %s64, 1
      %s66 = scalar_select %p63, %s64, %s65
      %p69 = pneg %p63
      %p70 = scmp.eq.s32.totalorder %s16, 1
      %p71 = por %p69, %p70
      %p72 = scmp.ne.s32.totalorder %s64, %s67
      %p73 = scmp.eq.s32.totalorder %s16, 0
      %p74 = por %p72, %p73
      %p75 = scmp.ne.s32.totalorder %s64, %s67
      %p76 = scmp.eq.s32.totalorder %s21, 1
      %p77 = por %p75, %p76
      %p78 = scmp.ne.s32.totalorder %s67, %s68
      %p79 = scmp.eq.s32.totalorder %s21, 0
      %p80 = por %p78, %p79
      %p81 = scmp.ne.s32.totalorder %s67, %s68
      %p82 = scmp.eq.s32.totalorder %s22, 1
      %p83 = por %p81, %p82
      %p85 = scmp.ne.s32.totalorder %s68, %s84
      %p86 = scmp.eq.s32.totalorder %s22, 0
      %p87 = por %p85, %p86
      %s88 = ssub.s32 %s24, %s31
      %p89 = scmp.eq.s32.totalorder %s88, 0
      %s91 = sadd.s32 %s90, 1
      %s92 = scalar_select %p89, %s90, %s91
      %p95 = pneg %p89
      %p96 = scmp.eq.s32.totalorder %s16, 1
      %p97 = por %p95, %p96
      %p98 = scmp.ne.s32.totalorder %s90, %s93
      %p99 = scmp.eq.s32.totalorder %s16, 0
      %p100 = por %p98, %p99
      %p101 = scmp.ne.s32.totalorder %s90, %s93
      %p102 = scmp.eq.s32.totalorder %s21, 1
      %p103 = por %p101, %p102
      %p104 = scmp.ne.s32.totalorder %s93, %s94
      %p105 = scmp.eq.s32.totalorder %s21, 0
      %p106 = por %p104, %p105
      %p107 = scmp.ne.s32.totalorder %s93, %s94
      %p108 = scmp.eq.s32.totalorder %s22, 1
      %p109 = por %p107, %p108
      %p111 = scmp.ne.s32.totalorder %s94, %s110
      %p112 = scmp.eq.s32.totalorder %s22, 0
      %p113 = por %p111, %p112
      %s114 = ssub.s32 %s23, %s35
      %s115 = ssub.s32 %s24, %s31
      %s116 = sor.u32 %s114, %s115
      %p117 = scmp.eq.s32.totalorder %s116, 0
      %s119 = sadd.s32 %s118, 1
      %s120 = scalar_select %p117, %s118, %s119
      %p123 = pneg %p117
      %p124 = scmp.eq.s32.totalorder %s16, 1
      %p125 = por %p123, %p124
      %p126 = scmp.ne.s32.totalorder %s118, %s121
      %p127 = scmp.eq.s32.totalorder %s16, 0
      %p128 = por %p126, %p127
      %p129 = scmp.ne.s32.totalorder %s118, %s121
      %p130 = scmp.eq.s32.totalorder %s21, 1
      %p131 = por %p129, %p130
      %p132 = scmp.ne.s32.totalorder %s121, %s122
      %p133 = scmp.eq.s32.totalorder %s21, 0
      %p134 = por %p132, %p133
      %p135 = scmp.ne.s32.totalorder %s121, %s122
      %p136 = scmp.eq.s32.totalorder %s22, 1
      %p137 = por %p135, %p136
      %p139 = scmp.ne.s32.totalorder %s122, %s138
      %p140 = scmp.eq.s32.totalorder %s22, 0
      %p141 = por %p139, %p140
      %p142 = scmp.le.s32.totalorder 1, %s16
      %p143 = scmp.lt.s32.totalorder %s16, 3
      %p144 = pnand %p142, %p143
      %p145 = pneg %p144
      // Predicated region
      $region9: #{tpu_custom_call.1} parent=5 // pred_check
        _
      $region10: #{tpu_custom_call.1} parent=5 // pred_check_branch
        %147 = sbr.rel (%p144) target = $region12
      $region11: #{tpu_custom_call.1} parent=5 // pred_region
        %s148 = ssub.s32 %s16, 1
        // Predicated region
        $region13: #{tpu_custom_call.1} parent=11 // pred_check
          %p149 = pneg %p54
        $region14: #{tpu_custom_call.1} parent=11 // pred_check_branch
          %151 = sbr.rel (%p149) target = $region16
        $region15: #{tpu_custom_call.1} parent=11 // pred_region
          %s152 = smul.u32 2, %s25
          %154 = vsyncadd [#allocation3], 0
          %s155 = smul.addr %s152, 7
          %s156 = smul.addr %s155, 4
          %s157 = scalar_lea.hbm %s0, %s156
          %s158 = sshll.u32 %s157, 4
          %s159 = int_to_ptr.hbm [resolvable:$true] %s158
          %s160 = sshll.u32 [#allocation2], 4
          %s161 = int_to_ptr.vmem [resolvable:$true] %s160
          %166 = dma.hbm_to_vmem [thread:$0]  %s159, 896, %s161, [#allocation3], 448, 448, 28
        $region16: #{tpu_custom_call.1} parent=11 // pred_fallthru
          _
      $region12: #{tpu_custom_call.1} parent=5 // pred_fallthru
        _
      %p167 = scmp.lt.s32.totalorder %s16, 2
      // Predicated region
      $region17: #{tpu_custom_call.1} parent=5 // pred_check
        %p168 = pneg %p167
      $region18: #{tpu_custom_call.1} parent=5 // pred_check_branch
        %170 = sbr.rel (%p168) target = $region20
      $region19: #{tpu_custom_call.1} parent=5 // pred_region
        // Predicated region
        $region21: #{tpu_custom_call.1} parent=19 // pred_check
          %p171 = pneg %p74
        $region22: #{tpu_custom_call.1} parent=19 // pred_check_branch
          %173 = sbr.rel (%p171) target = $region24
        $region23: #{tpu_custom_call.1} parent=19 // pred_region
          %s174 = sand.u32 %s16, 1
          %s175 = scalar_lea.sflag [#allocation6], %s174
          %s176 = sand.u32 %s64, 1
          %s177 = smul.addr %s176, 1792
          %s178 = scalar_lea.vmem [#allocation5], %s177
          %s179 = smul.u32 4, %s24
          %181 = vsyncadd %s175, 0
          %s182 = smul.addr %s179, 4
          %s183 = scalar_lea.hbm %s1, %s182
          %s184 = sshll.u32 %s183, 4
          %s185 = int_to_ptr.hbm [resolvable:$true] %s184
          %s186 = sshll.u32 %s178, 4
          %s187 = int_to_ptr.vmem [resolvable:$true] %s186
          %192 = dma.hbm_to_vmem [thread:$0]  %s185, 28672, %s187, %s175, 512, 256, 16
        $region24: #{tpu_custom_call.1} parent=19 // pred_fallthru
          _
        // Predicated region
        $region25: #{tpu_custom_call.1} parent=19 // pred_check
          %p193 = pneg %p100
        $region26: #{tpu_custom_call.1} parent=19 // pred_check_branch
          %195 = sbr.rel (%p193) target = $region28
        $region27: #{tpu_custom_call.1} parent=19 // pred_region
          %s196 = sand.u32 %s16, 1
          %s197 = scalar_lea.sflag [#allocation6], %s196
          %s198 = sand.u32 %s90, 1
          %s199 = smul.addr %s198, 4
          %s200 = scalar_lea.vmem [#allocation7], %s199
          %s201 = smul.u32 4, %s24
          %203 = vsyncadd %s197, 0
          %s204 = scalar_lea.hbm %s2, %s201
          %s206 = sshll.u32 %s204, 4
          %s207 = int_to_ptr.hbm [resolvable:$true] %s206
          %s208 = sshll.u32 %s200, 4
          %s209 = int_to_ptr.vmem [resolvable:$true] %s208
          %211 = dma.hbm_to_vmem [thread:$0]  %s207, 64, %s209, %s197
        $region28: #{tpu_custom_call.1} parent=19 // pred_fallthru
          _
      $region20: #{tpu_custom_call.1} parent=5 // pred_fallthru
        _
      %p212 = scmp.le.s32.totalorder 1, %s16
      %p213 = scmp.lt.s32.totalorder %s16, 3
      %p214 = pnand %p212, %p213
      %p215 = pneg %p214
      // Predicated region
      $region29: #{tpu_custom_call.1} parent=5 // pred_check
        _
      $region30: #{tpu_custom_call.1} parent=5 // pred_check_branch
        %217 = sbr.rel (%p214) target = $region32
      $region31: #{tpu_custom_call.1} parent=5 // pred_region
        %s218 = ssub.s32 %s16, 1
        // Predicated region
        $region33: #{tpu_custom_call.1} parent=31 // pred_check
          %p219 = pneg %p54
        $region34: #{tpu_custom_call.1} parent=31 // pred_check_branch
          %221 = sbr.rel (%p219) target = $region36
        $region35: #{tpu_custom_call.1} parent=31 // pred_region
          %223 = dma.done [#allocation3], 896
        $region36: #{tpu_custom_call.1} parent=31 // pred_fallthru
          _
        %s224 = sand.u32 %s21, 1
        %s225 = scalar_lea.sflag [#allocation6], %s224
        %s226 = sand.u32 %s67, 1
        %s227 = smul.addr %s226, 1792
        %s228 = scalar_lea.vmem [#allocation5], %s227
        // Predicated region
        $region37: #{tpu_custom_call.1} parent=31 // pred_check
          %p229 = pneg %p80
        $region38: #{tpu_custom_call.1} parent=31 // pred_check_branch
          %231 = sbr.rel (%p229) target = $region40
        $region39: #{tpu_custom_call.1} parent=31 // pred_region
          %233 = dma.done %s225, 28672
        $region40: #{tpu_custom_call.1} parent=31 // pred_fallthru
          _
        %s234 = sand.u32 %s21, 1
        %s235 = scalar_lea.sflag [#allocation6], %s234
        %s236 = sand.u32 %s93, 1
        %s237 = smul.addr %s236, 4
        %s238 = scalar_lea.vmem [#allocation7], %s237
        // Predicated region
        $region41: #{tpu_custom_call.1} parent=31 // pred_check
          %p239 = pneg %p106
        $region42: #{tpu_custom_call.1} parent=31 // pred_check_branch
          %241 = sbr.rel (%p239) target = $region44
        $region43: #{tpu_custom_call.1} parent=31 // pred_region
          %243 = dma.done %s235, 64
        $region44: #{tpu_custom_call.1} parent=31 // pred_fallthru
          _
        %p244 = pneg %p54
        %p245 = pneg %p51
        %s246 = sand.u32 %s21, 1
        %s247 = scalar_lea.sflag [#allocation6], %s246
        %s248 = sand.u32 %s67, 1
        %s249 = smul.addr %s248, 1792
        %s250 = scalar_lea.vmem [#allocation5], %s249
        %p251 = pneg %p80
        %p252 = pneg %p77
        %s253 = sand.u32 %s21, 1
        %s254 = scalar_lea.sflag [#allocation6], %s253
        %s255 = sand.u32 %s93, 1
        %s256 = smul.addr %s255, 4
        %s257 = scalar_lea.vmem [#allocation7], %s256
        %p258 = pneg %p106
        %p259 = pneg %p103
        %p260 = pneg %p134
        %p261 = pneg %p131
        %s262 = sand.u32 %s121, 1
        %s263 = scalar_lea.sflag [#allocation4], %s262
        %s264 = sand.u32 %s121, 1
        %s265 = smul.addr %s264, 64
        %s266 = scalar_lea.vmem [#allocation8], %s265
        %s267 = smul.u32 2, %s25
        %s268 = smul.u32 4, %s26
        %s269 = smul.u32 4, %s26
        %s270 = smul.u32 2, %s25
        %s271 = smul.u32 4, %s26
        %v272 = vld [vmem:[#allocation2] sm:$0xff]
        %v273 = vld [vmem:[#allocation2 + $0x8] sm:$0xff]
        %v274 = vld [vmem:[#allocation2 + $0x10] sm:$0xff]
        %v275 = vld [vmem:[#allocation2 + $0x18] sm:$0xf]
        %v276 = vld [vmem:[#allocation2 + $0x1c] sm:$0xff]
        %v277 = vld [vmem:[#allocation2 + $0x24] sm:$0xff]
        %v278 = vld [vmem:[#allocation2 + $0x2c] sm:$0xff]
        %v279 = vld [vmem:[#allocation2 + $0x34] sm:$0xf]
        %v280 = vld [vmem:[%s228] sm:$0xff]
        %v281 = vld [vmem:[%s228 + $0x8] sm:$0xff]
        %v282 = vld [vmem:[%s228 + $0x10] sm:$0xff]
        %v283 = vld [vmem:[%s228 + $0x18] sm:$0xff]
        %v284 = vld [vmem:[%s228 + $0x20] sm:$0xff]
        %v285 = vld [vmem:[%s228 + $0x28] sm:$0xff]
        %v286 = vld [vmem:[%s228 + $0x30] sm:$0xff]
        %v287 = vld [vmem:[%s228 + $0x38] sm:$0xff]
        %v288 = vld [vmem:[%s228 + $0x40] sm:$0xff]
        %v289 = vld [vmem:[%s228 + $0x48] sm:$0xff]
        %v290 = vld [vmem:[%s228 + $0x50] sm:$0xff]
        %v291 = vld [vmem:[%s228 + $0x58] sm:$0xff]
        %v292 = vld [vmem:[%s228 + $0x60] sm:$0xff]
        %v293 = vld [vmem:[%s228 + $0x68] sm:$0xff]
        %v294 = vld [vmem:[%s228 + $0x70] sm:$0xff]
        %v295 = vld [vmem:[%s228 + $0x78] sm:$0xff]
        %v296 = vld [vmem:[%s228 + $0x80] sm:$0xff]
        %v297 = vld [vmem:[%s228 + $0x88] sm:$0xff]
        %v298 = vld [vmem:[%s228 + $0x90] sm:$0xff]
        %v299 = vld [vmem:[%s228 + $0x98] sm:$0xff]
        %v300 = vld [vmem:[%s228 + $0xa0] sm:$0xff]
        %v301 = vld [vmem:[%s228 + $0xa8] sm:$0xff]
        %v302 = vld [vmem:[%s228 + $0xb0] sm:$0xff]
        %v303 = vld [vmem:[%s228 + $0xb8] sm:$0xff]
        %v304 = vld [vmem:[%s228 + $0xc0] sm:$0xff]
        %v305 = vld [vmem:[%s228 + $0xc8] sm:$0xff]
        %v306 = vld [vmem:[%s228 + $0xd0] sm:$0xff]
        %v307 = vld [vmem:[%s228 + $0xd8] sm:$0xff]
        %v308 = vld [vmem:[%s228 + $0xe0] sm:$0xff]
        %v309 = vld [vmem:[%s228 + $0xe8] sm:$0xff]
        %v310 = vld [vmem:[%s228 + $0xf0] sm:$0xff]
        %v311 = vld [vmem:[%s228 + $0xf8] sm:$0xff]
        %v312 = vld [vmem:[%s228 + $0x100] sm:$0xff]
        %v313 = vld [vmem:[%s228 + $0x108] sm:$0xff]
        %v314 = vld [vmem:[%s228 + $0x110] sm:$0xff]
        %v315 = vld [vmem:[%s228 + $0x118] sm:$0xff]
        %v316 = vld [vmem:[%s228 + $0x120] sm:$0xff]
        %v317 = vld [vmem:[%s228 + $0x128] sm:$0xff]
        %v318 = vld [vmem:[%s228 + $0x130] sm:$0xff]
        %v319 = vld [vmem:[%s228 + $0x138] sm:$0xff]
        %v320 = vld [vmem:[%s228 + $0x140] sm:$0xff]
        %v321 = vld [vmem:[%s228 + $0x148] sm:$0xff]
        %v322 = vld [vmem:[%s228 + $0x150] sm:$0xff]
        %v323 = vld [vmem:[%s228 + $0x158] sm:$0xff]
        %v324 = vld [vmem:[%s228 + $0x160] sm:$0xff]
        %v325 = vld [vmem:[%s228 + $0x168] sm:$0xff]
        %v326 = vld [vmem:[%s228 + $0x170] sm:$0xff]
        %v327 = vld [vmem:[%s228 + $0x178] sm:$0xff]
        %v328 = vld [vmem:[%s228 + $0x180] sm:$0xff]
        %v329 = vld [vmem:[%s228 + $0x188] sm:$0xff]
        %v330 = vld [vmem:[%s228 + $0x190] sm:$0xff]
        %v331 = vld [vmem:[%s228 + $0x198] sm:$0xff]
        %v332 = vld [vmem:[%s228 + $0x1a0] sm:$0xff]
        %v333 = vld [vmem:[%s228 + $0x1a8] sm:$0xff]
        %v334 = vld [vmem:[%s228 + $0x1b0] sm:$0xff]
        %v335 = vld [vmem:[%s228 + $0x1b8] sm:$0xff]
        %v336 = vld [vmem:[%s228 + $0x1c0] sm:$0xff]
        %v337 = vld [vmem:[%s228 + $0x1c8] sm:$0xff]
        %v338 = vld [vmem:[%s228 + $0x1d0] sm:$0xff]
        %v339 = vld [vmem:[%s228 + $0x1d8] sm:$0xff]
        %v340 = vld [vmem:[%s228 + $0x1e0] sm:$0xff]
        %v341 = vld [vmem:[%s228 + $0x1e8] sm:$0xff]
        %v342 = vld [vmem:[%s228 + $0x1f0] sm:$0xff]
        %v343 = vld [vmem:[%s228 + $0x1f8] sm:$0xff]
        %v344 = vld [vmem:[%s228 + $0x200] sm:$0xff]
        %v345 = vld [vmem:[%s228 + $0x208] sm:$0xff]
        %v346 = vld [vmem:[%s228 + $0x210] sm:$0xff]
        %v347 = vld [vmem:[%s228 + $0x218] sm:$0xff]
        %v348 = vld [vmem:[%s228 + $0x220] sm:$0xff]
        %v349 = vld [vmem:[%s228 + $0x228] sm:$0xff]
        %v350 = vld [vmem:[%s228 + $0x230] sm:$0xff]
        %v351 = vld [vmem:[%s228 + $0x238] sm:$0xff]
        %v352 = vld [vmem:[%s228 + $0x240] sm:$0xff]
        %v353 = vld [vmem:[%s228 + $0x248] sm:$0xff]
        %v354 = vld [vmem:[%s228 + $0x250] sm:$0xff]
        %v355 = vld [vmem:[%s228 + $0x258] sm:$0xff]
        %v356 = vld [vmem:[%s228 + $0x260] sm:$0xff]
        %v357 = vld [vmem:[%s228 + $0x268] sm:$0xff]
        %v358 = vld [vmem:[%s228 + $0x270] sm:$0xff]
        %v359 = vld [vmem:[%s228 + $0x278] sm:$0xff]
        %v360 = vld [vmem:[%s228 + $0x280] sm:$0xff]
        %v361 = vld [vmem:[%s228 + $0x288] sm:$0xff]
        %v362 = vld [vmem:[%s228 + $0x290] sm:$0xff]
        %v363 = vld [vmem:[%s228 + $0x298] sm:$0xff]
        %v364 = vld [vmem:[%s228 + $0x2a0] sm:$0xff]
        %v365 = vld [vmem:[%s228 + $0x2a8] sm:$0xff]
        %v366 = vld [vmem:[%s228 + $0x2b0] sm:$0xff]
        %v367 = vld [vmem:[%s228 + $0x2b8] sm:$0xff]
        %v368 = vld [vmem:[%s228 + $0x2c0] sm:$0xff]
        %v369 = vld [vmem:[%s228 + $0x2c8] sm:$0xff]
        %v370 = vld [vmem:[%s228 + $0x2d0] sm:$0xff]
        %v371 = vld [vmem:[%s228 + $0x2d8] sm:$0xff]
        %v372 = vld [vmem:[%s228 + $0x2e0] sm:$0xff]
        %v373 = vld [vmem:[%s228 + $0x2e8] sm:$0xff]
        %v374 = vld [vmem:[%s228 + $0x2f0] sm:$0xff]
        %v375 = vld [vmem:[%s228 + $0x2f8] sm:$0xff]
        %v376 = vld [vmem:[%s228 + $0x300] sm:$0xff]
        %v377 = vld [vmem:[%s228 + $0x308] sm:$0xff]
        %v378 = vld [vmem:[%s228 + $0x310] sm:$0xff]
        %v379 = vld [vmem:[%s228 + $0x318] sm:$0xff]
        %v380 = vld [vmem:[%s228 + $0x320] sm:$0xff]
        %v381 = vld [vmem:[%s228 + $0x328] sm:$0xff]
        %v382 = vld [vmem:[%s228 + $0x330] sm:$0xff]
        %v383 = vld [vmem:[%s228 + $0x338] sm:$0xff]
        %v384 = vld [vmem:[%s228 + $0x340] sm:$0xff]
        %v385 = vld [vmem:[%s228 + $0x348] sm:$0xff]
        %v386 = vld [vmem:[%s228 + $0x350] sm:$0xff]
        %v387 = vld [vmem:[%s228 + $0x358] sm:$0xff]
        %v388 = vld [vmem:[%s228 + $0x360] sm:$0xff]
        %v389 = vld [vmem:[%s228 + $0x368] sm:$0xff]
        %v390 = vld [vmem:[%s228 + $0x370] sm:$0xff]
        %v391 = vld [vmem:[%s228 + $0x378] sm:$0xff]
        %v392 = vld [vmem:[%s228 + $0x380] sm:$0xff]
        %v393 = vld [vmem:[%s228 + $0x388] sm:$0xff]
        %v394 = vld [vmem:[%s228 + $0x390] sm:$0xff]
        %v395 = vld [vmem:[%s228 + $0x398] sm:$0xff]
        %v396 = vld [vmem:[%s228 + $0x3a0] sm:$0xff]
        %v397 = vld [vmem:[%s228 + $0x3a8] sm:$0xff]
        %v398 = vld [vmem:[%s228 + $0x3b0] sm:$0xff]
        %v399 = vld [vmem:[%s228 + $0x3b8] sm:$0xff]
        %v400 = vld [vmem:[%s228 + $0x3c0] sm:$0xff]
        %v401 = vld [vmem:[%s228 + $0x3c8] sm:$0xff]
        %v402 = vld [vmem:[%s228 + $0x3d0] sm:$0xff]
        %v403 = vld [vmem:[%s228 + $0x3d8] sm:$0xff]
        %v404 = vld [vmem:[%s228 + $0x3e0] sm:$0xff]
        %v405 = vld [vmem:[%s228 + $0x3e8] sm:$0xff]
        %v406 = vld [vmem:[%s228 + $0x3f0] sm:$0xff]
        %v407 = vld [vmem:[%s228 + $0x3f8] sm:$0xff]
        %v408 = vld [vmem:[%s228 + $0x400] sm:$0xff]
        %v409 = vld [vmem:[%s228 + $0x408] sm:$0xff]
        %v410 = vld [vmem:[%s228 + $0x410] sm:$0xff]
        %v411 = vld [vmem:[%s228 + $0x418] sm:$0xff]
        %v412 = vld [vmem:[%s228 + $0x420] sm:$0xff]
        %v413 = vld [vmem:[%s228 + $0x428] sm:$0xff]
        %v414 = vld [vmem:[%s228 + $0x430] sm:$0xff]
        %v415 = vld [vmem:[%s228 + $0x438] sm:$0xff]
        %v416 = vld [vmem:[%s228 + $0x440] sm:$0xff]
        %v417 = vld [vmem:[%s228 + $0x448] sm:$0xff]
        %v418 = vld [vmem:[%s228 + $0x450] sm:$0xff]
        %v419 = vld [vmem:[%s228 + $0x458] sm:$0xff]
        %v420 = vld [vmem:[%s228 + $0x460] sm:$0xff]
        %v421 = vld [vmem:[%s228 + $0x468] sm:$0xff]
        %v422 = vld [vmem:[%s228 + $0x470] sm:$0xff]
        %v423 = vld [vmem:[%s228 + $0x478] sm:$0xff]
        %v424 = vld [vmem:[%s228 + $0x480] sm:$0xff]
        %v425 = vld [vmem:[%s228 + $0x488] sm:$0xff]
        %v426 = vld [vmem:[%s228 + $0x490] sm:$0xff]
        %v427 = vld [vmem:[%s228 + $0x498] sm:$0xff]
        %v428 = vld [vmem:[%s228 + $0x4a0] sm:$0xff]
        %v429 = vld [vmem:[%s228 + $0x4a8] sm:$0xff]
        %v430 = vld [vmem:[%s228 + $0x4b0] sm:$0xff]
        %v431 = vld [vmem:[%s228 + $0x4b8] sm:$0xff]
        %v432 = vld [vmem:[%s228 + $0x4c0] sm:$0xff]
        %v433 = vld [vmem:[%s228 + $0x4c8] sm:$0xff]
        %v434 = vld [vmem:[%s228 + $0x4d0] sm:$0xff]
        %v435 = vld [vmem:[%s228 + $0x4d8] sm:$0xff]
        %v436 = vld [vmem:[%s228 + $0x4e0] sm:$0xff]
        %v437 = vld [vmem:[%s228 + $0x4e8] sm:$0xff]
        %v438 = vld [vmem:[%s228 + $0x4f0] sm:$0xff]
        %v439 = vld [vmem:[%s228 + $0x4f8] sm:$0xff]
        %v440 = vld [vmem:[%s228 + $0x500] sm:$0xff]
        %v441 = vld [vmem:[%s228 + $0x508] sm:$0xff]
        %v442 = vld [vmem:[%s228 + $0x510] sm:$0xff]
        %v443 = vld [vmem:[%s228 + $0x518] sm:$0xff]
        %v444 = vld [vmem:[%s228 + $0x520] sm:$0xff]
        %v445 = vld [vmem:[%s228 + $0x528] sm:$0xff]
        %v446 = vld [vmem:[%s228 + $0x530] sm:$0xff]
        %v447 = vld [vmem:[%s228 + $0x538] sm:$0xff]
        %v448 = vld [vmem:[%s228 + $0x540] sm:$0xff]
        %v449 = vld [vmem:[%s228 + $0x548] sm:$0xff]
        %v450 = vld [vmem:[%s228 + $0x550] sm:$0xff]
        %v451 = vld [vmem:[%s228 + $0x558] sm:$0xff]
        %v452 = vld [vmem:[%s228 + $0x560] sm:$0xff]
        %v453 = vld [vmem:[%s228 + $0x568] sm:$0xff]
        %v454 = vld [vmem:[%s228 + $0x570] sm:$0xff]
        %v455 = vld [vmem:[%s228 + $0x578] sm:$0xff]
        %v456 = vld [vmem:[%s228 + $0x580] sm:$0xff]
        %v457 = vld [vmem:[%s228 + $0x588] sm:$0xff]
        %v458 = vld [vmem:[%s228 + $0x590] sm:$0xff]
        %v459 = vld [vmem:[%s228 + $0x598] sm:$0xff]
        %v460 = vld [vmem:[%s228 + $0x5a0] sm:$0xff]
        %v461 = vld [vmem:[%s228 + $0x5a8] sm:$0xff]
        %v462 = vld [vmem:[%s228 + $0x5b0] sm:$0xff]
        %v463 = vld [vmem:[%s228 + $0x5b8] sm:$0xff]
        %v464 = vld [vmem:[%s228 + $0x5c0] sm:$0xff]
        %v465 = vld [vmem:[%s228 + $0x5c8] sm:$0xff]
        %v466 = vld [vmem:[%s228 + $0x5d0] sm:$0xff]
        %v467 = vld [vmem:[%s228 + $0x5d8] sm:$0xff]
        %v468 = vld [vmem:[%s228 + $0x5e0] sm:$0xff]
        %v469 = vld [vmem:[%s228 + $0x5e8] sm:$0xff]
        %v470 = vld [vmem:[%s228 + $0x5f0] sm:$0xff]
        %v471 = vld [vmem:[%s228 + $0x5f8] sm:$0xff]
        %v472 = vld [vmem:[%s228 + $0x600] sm:$0xff]
        %v473 = vld [vmem:[%s228 + $0x608] sm:$0xff]
        %v474 = vld [vmem:[%s228 + $0x610] sm:$0xff]
        %v475 = vld [vmem:[%s228 + $0x618] sm:$0xff]
        %v476 = vld [vmem:[%s228 + $0x620] sm:$0xff]
        %v477 = vld [vmem:[%s228 + $0x628] sm:$0xff]
        %v478 = vld [vmem:[%s228 + $0x630] sm:$0xff]
        %v479 = vld [vmem:[%s228 + $0x638] sm:$0xff]
        %v480 = vld [vmem:[%s228 + $0x640] sm:$0xff]
        %v481 = vld [vmem:[%s228 + $0x648] sm:$0xff]
        %v482 = vld [vmem:[%s228 + $0x650] sm:$0xff]
        %v483 = vld [vmem:[%s228 + $0x658] sm:$0xff]
        %v484 = vld [vmem:[%s228 + $0x660] sm:$0xff]
        %v485 = vld [vmem:[%s228 + $0x668] sm:$0xff]
        %v486 = vld [vmem:[%s228 + $0x670] sm:$0xff]
        %v487 = vld [vmem:[%s228 + $0x678] sm:$0xff]
        %v488 = vld [vmem:[%s228 + $0x680] sm:$0xff]
        %v489 = vld [vmem:[%s228 + $0x688] sm:$0xff]
        %v490 = vld [vmem:[%s228 + $0x690] sm:$0xff]
        %v491 = vld [vmem:[%s228 + $0x698] sm:$0xff]
        %v492 = vld [vmem:[%s228 + $0x6a0] sm:$0xff]
        %v493 = vld [vmem:[%s228 + $0x6a8] sm:$0xff]
        %v494 = vld [vmem:[%s228 + $0x6b0] sm:$0xff]
        %v495 = vld [vmem:[%s228 + $0x6b8] sm:$0xff]
        %v496 = vld [vmem:[%s228 + $0x6c0] sm:$0xff]
        %v497 = vld [vmem:[%s228 + $0x6c8] sm:$0xff]
        %v498 = vld [vmem:[%s228 + $0x6d0] sm:$0xff]
        %v499 = vld [vmem:[%s228 + $0x6d8] sm:$0xff]
        %v500 = vld [vmem:[%s228 + $0x6e0] sm:$0xff]
        %v501 = vld [vmem:[%s228 + $0x6e8] sm:$0xff]
        %v502 = vld [vmem:[%s228 + $0x6f0] sm:$0xff]
        %v503 = vld [vmem:[%s228 + $0x6f8] sm:$0xff]
        %v504 = vld [vmem:[%s238] sm:$0xf]
        %v506 = vperm.slane %v504, 0
        %v507 = vperm.slane %v504, 1
        %v508 = vperm.slane %v504, 2
        %v509 = vperm.slane %v504, 3
        %v522 = vunpack.c.l.b16 %v272
        %v523 = vunpack.c.h.b16 %v272
        %v524 = vunpack.c.l.b16 %v273
        %v525 = vunpack.c.h.b16 %v273
        %v526 = vunpack.c.l.b16 %v274
        %v527 = vunpack.c.h.b16 %v274
        %v528 = vunpack.c.l.b16 %v275
        %v529 = vunpack.c.l.b16 %v276
        %v530 = vunpack.c.h.b16 %v276
        %v531 = vunpack.c.l.b16 %v277
        %v532 = vunpack.c.h.b16 %v277
        %v533 = vunpack.c.l.b16 %v278
        %v534 = vunpack.c.h.b16 %v278
        %v535 = vunpack.c.l.b16 %v279
        %v536 = vpack.c.b16 %v529, %v522
        %v537 = vpack.c.b16 %v530, %v523
        %v538 = vpack.c.b16 %v531, %v524
        %v539 = vpack.c.b16 %v532, %v525
        %v540 = vpack.c.b16 %v533, %v526
        %v541 = vpack.c.b16 %v534, %v527
        %v542 = vpack.c.b16 %v535, %v528
        %v774 = vunpack.c.l.b16 %v280
        %v775 = vunpack.c.h.b16 %v280
        %v776 = vunpack.c.l.b16 %v281
        %v777 = vunpack.c.h.b16 %v281
        %v778 = vunpack.c.l.b16 %v282
        %v779 = vunpack.c.h.b16 %v282
        %v780 = vunpack.c.l.b16 %v283
        %v781 = vunpack.c.h.b16 %v283
        %v782 = vunpack.c.l.b16 %v284
        %v783 = vunpack.c.h.b16 %v284
        %v784 = vunpack.c.l.b16 %v285
        %v785 = vunpack.c.h.b16 %v285
        %v786 = vunpack.c.l.b16 %v286
        %v787 = vunpack.c.h.b16 %v286
        %v788 = vunpack.c.l.b16 %v287
        %v789 = vunpack.c.h.b16 %v287
        %v790 = vunpack.c.l.b16 %v288
        %v791 = vunpack.c.h.b16 %v288
        %v792 = vunpack.c.l.b16 %v289
        %v793 = vunpack.c.h.b16 %v289
        %v794 = vunpack.c.l.b16 %v290
        %v795 = vunpack.c.h.b16 %v290
        %v796 = vunpack.c.l.b16 %v291
        %v797 = vunpack.c.h.b16 %v291
        %v798 = vunpack.c.l.b16 %v292
        %v799 = vunpack.c.h.b16 %v292
        %v800 = vunpack.c.l.b16 %v293
        %v801 = vunpack.c.h.b16 %v293
        %v802 = vunpack.c.l.b16 %v294
        %v803 = vunpack.c.h.b16 %v294
        %v804 = vunpack.c.l.b16 %v295
        %v805 = vunpack.c.h.b16 %v295
        %v806 = vunpack.c.l.b16 %v296
        %v807 = vunpack.c.h.b16 %v296
        %v808 = vunpack.c.l.b16 %v297
        %v809 = vunpack.c.h.b16 %v297
        %v810 = vunpack.c.l.b16 %v298
        %v811 = vunpack.c.h.b16 %v298
        %v812 = vunpack.c.l.b16 %v299
        %v813 = vunpack.c.h.b16 %v299
        %v814 = vunpack.c.l.b16 %v300
        %v815 = vunpack.c.h.b16 %v300
        %v816 = vunpack.c.l.b16 %v301
        %v817 = vunpack.c.h.b16 %v301
        %v818 = vunpack.c.l.b16 %v302
        %v819 = vunpack.c.h.b16 %v302
        %v820 = vunpack.c.l.b16 %v303
        %v821 = vunpack.c.h.b16 %v303
        %v822 = vunpack.c.l.b16 %v304
        %v823 = vunpack.c.h.b16 %v304
        %v824 = vunpack.c.l.b16 %v305
        %v825 = vunpack.c.h.b16 %v305
        %v826 = vunpack.c.l.b16 %v306
        %v827 = vunpack.c.h.b16 %v306
        %v828 = vunpack.c.l.b16 %v307
        %v829 = vunpack.c.h.b16 %v307
        %v830 = vunpack.c.l.b16 %v308
        %v831 = vunpack.c.h.b16 %v308
        %v832 = vunpack.c.l.b16 %v309
        %v833 = vunpack.c.h.b16 %v309
        %v834 = vunpack.c.l.b16 %v310
        %v835 = vunpack.c.h.b16 %v310
        %v836 = vunpack.c.l.b16 %v311
        %v837 = vunpack.c.h.b16 %v311
        %v838 = vunpack.c.l.b16 %v312
        %v839 = vunpack.c.h.b16 %v312
        %v840 = vunpack.c.l.b16 %v313
        %v841 = vunpack.c.h.b16 %v313
        %v842 = vunpack.c.l.b16 %v314
        %v843 = vunpack.c.h.b16 %v314
        %v844 = vunpack.c.l.b16 %v315
        %v845 = vunpack.c.h.b16 %v315
        %v846 = vunpack.c.l.b16 %v316
        %v847 = vunpack.c.h.b16 %v316
        %v848 = vunpack.c.l.b16 %v317
        %v849 = vunpack.c.h.b16 %v317
        %v850 = vunpack.c.l.b16 %v318
        %v851 = vunpack.c.h.b16 %v318
        %v852 = vunpack.c.l.b16 %v319
        %v853 = vunpack.c.h.b16 %v319
        %v854 = vunpack.c.l.b16 %v320
        %v855 = vunpack.c.h.b16 %v320
        %v856 = vunpack.c.l.b16 %v321
        %v857 = vunpack.c.h.b16 %v321
        %v858 = vunpack.c.l.b16 %v322
        %v859 = vunpack.c.h.b16 %v322
        %v860 = vunpack.c.l.b16 %v323
        %v861 = vunpack.c.h.b16 %v323
        %v862 = vunpack.c.l.b16 %v324
        %v863 = vunpack.c.h.b16 %v324
        %v864 = vunpack.c.l.b16 %v325
        %v865 = vunpack.c.h.b16 %v325
        %v866 = vunpack.c.l.b16 %v326
        %v867 = vunpack.c.h.b16 %v326
        %v868 = vunpack.c.l.b16 %v327
        %v869 = vunpack.c.h.b16 %v327
        %v870 = vunpack.c.l.b16 %v328
        %v871 = vunpack.c.h.b16 %v328
        %v872 = vunpack.c.l.b16 %v329
        %v873 = vunpack.c.h.b16 %v329
        %v874 = vunpack.c.l.b16 %v330
        %v875 = vunpack.c.h.b16 %v330
        %v876 = vunpack.c.l.b16 %v331
        %v877 = vunpack.c.h.b16 %v331
        %v878 = vunpack.c.l.b16 %v332
        %v879 = vunpack.c.h.b16 %v332
        %v880 = vunpack.c.l.b16 %v333
        %v881 = vunpack.c.h.b16 %v333
        %v882 = vunpack.c.l.b16 %v334
        %v883 = vunpack.c.h.b16 %v334
        %v884 = vunpack.c.l.b16 %v335
        %v885 = vunpack.c.h.b16 %v335
        %v886 = vunpack.c.l.b16 %v336
        %v887 = vunpack.c.h.b16 %v336
        %v888 = vunpack.c.l.b16 %v337
        %v889 = vunpack.c.h.b16 %v337
        %v890 = vunpack.c.l.b16 %v338
        %v891 = vunpack.c.h.b16 %v338
        %v892 = vunpack.c.l.b16 %v339
        %v893 = vunpack.c.h.b16 %v339
        %v894 = vunpack.c.l.b16 %v340
        %v895 = vunpack.c.h.b16 %v340
        %v896 = vunpack.c.l.b16 %v341
        %v897 = vunpack.c.h.b16 %v341
        %v898 = vunpack.c.l.b16 %v342
        %v899 = vunpack.c.h.b16 %v342
        %v900 = vunpack.c.l.b16 %v343
        %v901 = vunpack.c.h.b16 %v343
        %v902 = vunpack.c.l.b16 %v344
        %v903 = vunpack.c.h.b16 %v344
        %v904 = vunpack.c.l.b16 %v345
        %v905 = vunpack.c.h.b16 %v345
        %v906 = vunpack.c.l.b16 %v346
        %v907 = vunpack.c.h.b16 %v346
        %v908 = vunpack.c.l.b16 %v347
        %v909 = vunpack.c.h.b16 %v347
        %v910 = vunpack.c.l.b16 %v348
        %v911 = vunpack.c.h.b16 %v348
        %v912 = vunpack.c.l.b16 %v349
        %v913 = vunpack.c.h.b16 %v349
        %v914 = vunpack.c.l.b16 %v350
        %v915 = vunpack.c.h.b16 %v350
        %v916 = vunpack.c.l.b16 %v351
        %v917 = vunpack.c.h.b16 %v351
        %v918 = vunpack.c.l.b16 %v352
        %v919 = vunpack.c.h.b16 %v352
        %v920 = vunpack.c.l.b16 %v353
        %v921 = vunpack.c.h.b16 %v353
        %v922 = vunpack.c.l.b16 %v354
        %v923 = vunpack.c.h.b16 %v354
        %v924 = vunpack.c.l.b16 %v355
        %v925 = vunpack.c.h.b16 %v355
        %v926 = vunpack.c.l.b16 %v356
        %v927 = vunpack.c.h.b16 %v356
        %v928 = vunpack.c.l.b16 %v357
        %v929 = vunpack.c.h.b16 %v357
        %v930 = vunpack.c.l.b16 %v358
        %v931 = vunpack.c.h.b16 %v358
        %v932 = vunpack.c.l.b16 %v359
        %v933 = vunpack.c.h.b16 %v359
        %v934 = vunpack.c.l.b16 %v360
        %v935 = vunpack.c.h.b16 %v360
        %v936 = vunpack.c.l.b16 %v361
        %v937 = vunpack.c.h.b16 %v361
        %v938 = vunpack.c.l.b16 %v362
        %v939 = vunpack.c.h.b16 %v362
        %v940 = vunpack.c.l.b16 %v363
        %v941 = vunpack.c.h.b16 %v363
        %v942 = vunpack.c.l.b16 %v364
        %v943 = vunpack.c.h.b16 %v364
        %v944 = vunpack.c.l.b16 %v365
        %v945 = vunpack.c.h.b16 %v365
        %v946 = vunpack.c.l.b16 %v366
        %v947 = vunpack.c.h.b16 %v366
        %v948 = vunpack.c.l.b16 %v367
        %v949 = vunpack.c.h.b16 %v367
        %v950 = vunpack.c.l.b16 %v368
        %v951 = vunpack.c.h.b16 %v368
        %v952 = vunpack.c.l.b16 %v369
        %v953 = vunpack.c.h.b16 %v369
        %v954 = vunpack.c.l.b16 %v370
        %v955 = vunpack.c.h.b16 %v370
        %v956 = vunpack.c.l.b16 %v371
        %v957 = vunpack.c.h.b16 %v371
        %v958 = vunpack.c.l.b16 %v372
        %v959 = vunpack.c.h.b16 %v372
        %v960 = vunpack.c.l.b16 %v373
        %v961 = vunpack.c.h.b16 %v373
        %v962 = vunpack.c.l.b16 %v374
        %v963 = vunpack.c.h.b16 %v374
        %v964 = vunpack.c.l.b16 %v375
        %v965 = vunpack.c.h.b16 %v375
        %v966 = vunpack.c.l.b16 %v376
        %v967 = vunpack.c.h.b16 %v376
        %v968 = vunpack.c.l.b16 %v377
        %v969 = vunpack.c.h.b16 %v377
        %v970 = vunpack.c.l.b16 %v378
        %v971 = vunpack.c.h.b16 %v378
        %v972 = vunpack.c.l.b16 %v379
        %v973 = vunpack.c.h.b16 %v379
        %v974 = vunpack.c.l.b16 %v380
        %v975 = vunpack.c.h.b16 %v380
        %v976 = vunpack.c.l.b16 %v381
        %v977 = vunpack.c.h.b16 %v381
        %v978 = vunpack.c.l.b16 %v382
        %v979 = vunpack.c.h.b16 %v382
        %v980 = vunpack.c.l.b16 %v383
        %v981 = vunpack.c.h.b16 %v383
        %v982 = vunpack.c.l.b16 %v384
        %v983 = vunpack.c.h.b16 %v384
        %v984 = vunpack.c.l.b16 %v385
        %v985 = vunpack.c.h.b16 %v385
        %v986 = vunpack.c.l.b16 %v386
        %v987 = vunpack.c.h.b16 %v386
        %v988 = vunpack.c.l.b16 %v387
        %v989 = vunpack.c.h.b16 %v387
        %v990 = vunpack.c.l.b16 %v388
        %v991 = vunpack.c.h.b16 %v388
        %v992 = vunpack.c.l.b16 %v389
        %v993 = vunpack.c.h.b16 %v389
        %v994 = vunpack.c.l.b16 %v390
        %v995 = vunpack.c.h.b16 %v390
        %v996 = vunpack.c.l.b16 %v391
        %v997 = vunpack.c.h.b16 %v391
        %v998 = vunpack.c.l.b16 %v392
        %v999 = vunpack.c.h.b16 %v392
        %v1000 = vunpack.c.l.b16 %v393
        %v1001 = vunpack.c.h.b16 %v393
        %v1002 = vunpack.c.l.b16 %v394
        %v1003 = vunpack.c.h.b16 %v394
        %v1004 = vunpack.c.l.b16 %v395
        %v1005 = vunpack.c.h.b16 %v395
        %v1006 = vunpack.c.l.b16 %v396
        %v1007 = vunpack.c.h.b16 %v396
        %v1008 = vunpack.c.l.b16 %v397
        %v1009 = vunpack.c.h.b16 %v397
        %v1010 = vunpack.c.l.b16 %v398
        %v1011 = vunpack.c.h.b16 %v398
        %v1012 = vunpack.c.l.b16 %v399
        %v1013 = vunpack.c.h.b16 %v399
        %v1014 = vunpack.c.l.b16 %v400
        %v1015 = vunpack.c.h.b16 %v400
        %v1016 = vunpack.c.l.b16 %v401
        %v1017 = vunpack.c.h.b16 %v401
        %v1018 = vunpack.c.l.b16 %v402
        %v1019 = vunpack.c.h.b16 %v402
        %v1020 = vunpack.c.l.b16 %v403
        %v1021 = vunpack.c.h.b16 %v403
        %v1022 = vunpack.c.l.b16 %v404
        %v1023 = vunpack.c.h.b16 %v404
        %v1024 = vunpack.c.l.b16 %v405
        %v1025 = vunpack.c.h.b16 %v405
        %v1026 = vunpack.c.l.b16 %v406
        %v1027 = vunpack.c.h.b16 %v406
        %v1028 = vunpack.c.l.b16 %v407
        %v1029 = vunpack.c.h.b16 %v407
        %v1030 = vunpack.c.l.b16 %v408
        %v1031 = vunpack.c.h.b16 %v408
        %v1032 = vunpack.c.l.b16 %v409
        %v1033 = vunpack.c.h.b16 %v409
        %v1034 = vunpack.c.l.b16 %v410
        %v1035 = vunpack.c.h.b16 %v410
        %v1036 = vunpack.c.l.b16 %v411
        %v1037 = vunpack.c.h.b16 %v411
        %v1038 = vunpack.c.l.b16 %v412
        %v1039 = vunpack.c.h.b16 %v412
        %v1040 = vunpack.c.l.b16 %v413
        %v1041 = vunpack.c.h.b16 %v413
        %v1042 = vunpack.c.l.b16 %v414
        %v1043 = vunpack.c.h.b16 %v414
        %v1044 = vunpack.c.l.b16 %v415
        %v1045 = vunpack.c.h.b16 %v415
        %v1046 = vunpack.c.l.b16 %v416
        %v1047 = vunpack.c.h.b16 %v416
        %v1048 = vunpack.c.l.b16 %v417
        %v1049 = vunpack.c.h.b16 %v417
        %v1050 = vunpack.c.l.b16 %v418
        %v1051 = vunpack.c.h.b16 %v418
        %v1052 = vunpack.c.l.b16 %v419
        %v1053 = vunpack.c.h.b16 %v419
        %v1054 = vunpack.c.l.b16 %v420
        %v1055 = vunpack.c.h.b16 %v420
        %v1056 = vunpack.c.l.b16 %v421
        %v1057 = vunpack.c.h.b16 %v421
        %v1058 = vunpack.c.l.b16 %v422
        %v1059 = vunpack.c.h.b16 %v422
        %v1060 = vunpack.c.l.b16 %v423
        %v1061 = vunpack.c.h.b16 %v423
        %v1062 = vunpack.c.l.b16 %v424
        %v1063 = vunpack.c.h.b16 %v424
        %v1064 = vunpack.c.l.b16 %v425
        %v1065 = vunpack.c.h.b16 %v425
        %v1066 = vunpack.c.l.b16 %v426
        %v1067 = vunpack.c.h.b16 %v426
        %v1068 = vunpack.c.l.b16 %v427
        %v1069 = vunpack.c.h.b16 %v427
        %v1070 = vunpack.c.l.b16 %v428
        %v1071 = vunpack.c.h.b16 %v428
        %v1072 = vunpack.c.l.b16 %v429
        %v1073 = vunpack.c.h.b16 %v429
        %v1074 = vunpack.c.l.b16 %v430
        %v1075 = vunpack.c.h.b16 %v430
        %v1076 = vunpack.c.l.b16 %v431
        %v1077 = vunpack.c.h.b16 %v431
        %v1078 = vunpack.c.l.b16 %v432
        %v1079 = vunpack.c.h.b16 %v432
        %v1080 = vunpack.c.l.b16 %v433
        %v1081 = vunpack.c.h.b16 %v433
        %v1082 = vunpack.c.l.b16 %v434
        %v1083 = vunpack.c.h.b16 %v434
        %v1084 = vunpack.c.l.b16 %v435
        %v1085 = vunpack.c.h.b16 %v435
        %v1086 = vunpack.c.l.b16 %v436
        %v1087 = vunpack.c.h.b16 %v436
        %v1088 = vunpack.c.l.b16 %v437
        %v1089 = vunpack.c.h.b16 %v437
        %v1090 = vunpack.c.l.b16 %v438
        %v1091 = vunpack.c.h.b16 %v438
        %v1092 = vunpack.c.l.b16 %v439
        %v1093 = vunpack.c.h.b16 %v439
        %v1094 = vunpack.c.l.b16 %v440
        %v1095 = vunpack.c.h.b16 %v440
        %v1096 = vunpack.c.l.b16 %v441
        %v1097 = vunpack.c.h.b16 %v441
        %v1098 = vunpack.c.l.b16 %v442
        %v1099 = vunpack.c.h.b16 %v442
        %v1100 = vunpack.c.l.b16 %v443
        %v1101 = vunpack.c.h.b16 %v443
        %v1102 = vunpack.c.l.b16 %v444
        %v1103 = vunpack.c.h.b16 %v444
        %v1104 = vunpack.c.l.b16 %v445
        %v1105 = vunpack.c.h.b16 %v445
        %v1106 = vunpack.c.l.b16 %v446
        %v1107 = vunpack.c.h.b16 %v446
        %v1108 = vunpack.c.l.b16 %v447
        %v1109 = vunpack.c.h.b16 %v447
        %v1110 = vunpack.c.l.b16 %v448
        %v1111 = vunpack.c.h.b16 %v448
        %v1112 = vunpack.c.l.b16 %v449
        %v1113 = vunpack.c.h.b16 %v449
        %v1114 = vunpack.c.l.b16 %v450
        %v1115 = vunpack.c.h.b16 %v450
        %v1116 = vunpack.c.l.b16 %v451
        %v1117 = vunpack.c.h.b16 %v451
        %v1118 = vunpack.c.l.b16 %v452
        %v1119 = vunpack.c.h.b16 %v452
        %v1120 = vunpack.c.l.b16 %v453
        %v1121 = vunpack.c.h.b16 %v453
        %v1122 = vunpack.c.l.b16 %v454
        %v1123 = vunpack.c.h.b16 %v454
        %v1124 = vunpack.c.l.b16 %v455
        %v1125 = vunpack.c.h.b16 %v455
        %v1126 = vunpack.c.l.b16 %v456
        %v1127 = vunpack.c.h.b16 %v456
        %v1128 = vunpack.c.l.b16 %v457
        %v1129 = vunpack.c.h.b16 %v457
        %v1130 = vunpack.c.l.b16 %v458
        %v1131 = vunpack.c.h.b16 %v458
        %v1132 = vunpack.c.l.b16 %v459
        %v1133 = vunpack.c.h.b16 %v459
        %v1134 = vunpack.c.l.b16 %v460
        %v1135 = vunpack.c.h.b16 %v460
        %v1136 = vunpack.c.l.b16 %v461
        %v1137 = vunpack.c.h.b16 %v461
        %v1138 = vunpack.c.l.b16 %v462
        %v1139 = vunpack.c.h.b16 %v462
        %v1140 = vunpack.c.l.b16 %v463
        %v1141 = vunpack.c.h.b16 %v463
        %v1142 = vunpack.c.l.b16 %v464
        %v1143 = vunpack.c.h.b16 %v464
        %v1144 = vunpack.c.l.b16 %v465
        %v1145 = vunpack.c.h.b16 %v465
        %v1146 = vunpack.c.l.b16 %v466
        %v1147 = vunpack.c.h.b16 %v466
        %v1148 = vunpack.c.l.b16 %v467
        %v1149 = vunpack.c.h.b16 %v467
        %v1150 = vunpack.c.l.b16 %v468
        %v1151 = vunpack.c.h.b16 %v468
        %v1152 = vunpack.c.l.b16 %v469
        %v1153 = vunpack.c.h.b16 %v469
        %v1154 = vunpack.c.l.b16 %v470
        %v1155 = vunpack.c.h.b16 %v470
        %v1156 = vunpack.c.l.b16 %v471
        %v1157 = vunpack.c.h.b16 %v471
        %v1158 = vunpack.c.l.b16 %v472
        %v1159 = vunpack.c.h.b16 %v472
        %v1160 = vunpack.c.l.b16 %v473
        %v1161 = vunpack.c.h.b16 %v473
        %v1162 = vunpack.c.l.b16 %v474
        %v1163 = vunpack.c.h.b16 %v474
        %v1164 = vunpack.c.l.b16 %v475
        %v1165 = vunpack.c.h.b16 %v475
        %v1166 = vunpack.c.l.b16 %v476
        %v1167 = vunpack.c.h.b16 %v476
        %v1168 = vunpack.c.l.b16 %v477
        %v1169 = vunpack.c.h.b16 %v477
        %v1170 = vunpack.c.l.b16 %v478
        %v1171 = vunpack.c.h.b16 %v478
        %v1172 = vunpack.c.l.b16 %v479
        %v1173 = vunpack.c.h.b16 %v479
        %v1174 = vunpack.c.l.b16 %v480
        %v1175 = vunpack.c.h.b16 %v480
        %v1176 = vunpack.c.l.b16 %v481
        %v1177 = vunpack.c.h.b16 %v481
        %v1178 = vunpack.c.l.b16 %v482
        %v1179 = vunpack.c.h.b16 %v482
        %v1180 = vunpack.c.l.b16 %v483
        %v1181 = vunpack.c.h.b16 %v483
        %v1182 = vunpack.c.l.b16 %v484
        %v1183 = vunpack.c.h.b16 %v484
        %v1184 = vunpack.c.l.b16 %v485
        %v1185 = vunpack.c.h.b16 %v485
        %v1186 = vunpack.c.l.b16 %v486
        %v1187 = vunpack.c.h.b16 %v486
        %v1188 = vunpack.c.l.b16 %v487
        %v1189 = vunpack.c.h.b16 %v487
        %v1190 = vunpack.c.l.b16 %v488
        %v1191 = vunpack.c.h.b16 %v488
        %v1192 = vunpack.c.l.b16 %v489
        %v1193 = vunpack.c.h.b16 %v489
        %v1194 = vunpack.c.l.b16 %v490
        %v1195 = vunpack.c.h.b16 %v490
        %v1196 = vunpack.c.l.b16 %v491
        %v1197 = vunpack.c.h.b16 %v491
        %v1198 = vunpack.c.l.b16 %v492
        %v1199 = vunpack.c.h.b16 %v492
        %v1200 = vunpack.c.l.b16 %v493
        %v1201 = vunpack.c.h.b16 %v493
        %v1202 = vunpack.c.l.b16 %v494
        %v1203 = vunpack.c.h.b16 %v494
        %v1204 = vunpack.c.l.b16 %v495
        %v1205 = vunpack.c.h.b16 %v495
        %v1206 = vunpack.c.l.b16 %v496
        %v1207 = vunpack.c.h.b16 %v496
        %v1208 = vunpack.c.l.b16 %v497
        %v1209 = vunpack.c.h.b16 %v497
        %v1210 = vunpack.c.l.b16 %v498
        %v1211 = vunpack.c.h.b16 %v498
        %v1212 = vunpack.c.l.b16 %v499
        %v1213 = vunpack.c.h.b16 %v499
        %v1214 = vunpack.c.l.b16 %v500
        %v1215 = vunpack.c.h.b16 %v500
        %v1216 = vunpack.c.l.b16 %v501
        %v1217 = vunpack.c.h.b16 %v501
        %v1218 = vunpack.c.l.b16 %v502
        %v1219 = vunpack.c.h.b16 %v502
        %v1220 = vunpack.c.l.b16 %v503
        %v1221 = vunpack.c.h.b16 %v503
        %v1222 = vpack.c.b16 %v778, %v774
        %v1223 = vpack.c.b16 %v779, %v775
        %v1224 = vpack.c.b16 %v780, %v776
        %v1225 = vpack.c.b16 %v781, %v777
        %v1226 = vpack.c.b16 %v786, %v782
        %v1227 = vpack.c.b16 %v787, %v783
        %v1228 = vpack.c.b16 %v788, %v784
        %v1229 = vpack.c.b16 %v789, %v785
        %v1230 = vpack.c.b16 %v794, %v790
        %v1231 = vpack.c.b16 %v795, %v791
        %v1232 = vpack.c.b16 %v796, %v792
        %v1233 = vpack.c.b16 %v797, %v793
        %v1234 = vpack.c.b16 %v802, %v798
        %v1235 = vpack.c.b16 %v803, %v799
        %v1236 = vpack.c.b16 %v804, %v800
        %v1237 = vpack.c.b16 %v805, %v801
        %v1238 = vpack.c.b16 %v810, %v806
        %v1239 = vpack.c.b16 %v811, %v807
        %v1240 = vpack.c.b16 %v812, %v808
        %v1241 = vpack.c.b16 %v813, %v809
        %v1242 = vpack.c.b16 %v818, %v814
        %v1243 = vpack.c.b16 %v819, %v815
        %v1244 = vpack.c.b16 %v820, %v816
        %v1245 = vpack.c.b16 %v821, %v817
        %v1246 = vpack.c.b16 %v826, %v822
        %v1247 = vpack.c.b16 %v827, %v823
        %v1248 = vpack.c.b16 %v828, %v824
        %v1249 = vpack.c.b16 %v829, %v825
        %v1250 = vpack.c.b16 %v834, %v830
        %v1251 = vpack.c.b16 %v835, %v831
        %v1252 = vpack.c.b16 %v836, %v832
        %v1253 = vpack.c.b16 %v837, %v833
        %v1254 = vpack.c.b16 %v842, %v838
        %v1255 = vpack.c.b16 %v843, %v839
        %v1256 = vpack.c.b16 %v844, %v840
        %v1257 = vpack.c.b16 %v845, %v841
        %v1258 = vpack.c.b16 %v850, %v846
        %v1259 = vpack.c.b16 %v851, %v847
        %v1260 = vpack.c.b16 %v852, %v848
        %v1261 = vpack.c.b16 %v853, %v849
        %v1262 = vpack.c.b16 %v858, %v854
        %v1263 = vpack.c.b16 %v859, %v855
        %v1264 = vpack.c.b16 %v860, %v856
        %v1265 = vpack.c.b16 %v861, %v857
        %v1266 = vpack.c.b16 %v866, %v862
        %v1267 = vpack.c.b16 %v867, %v863
        %v1268 = vpack.c.b16 %v868, %v864
        %v1269 = vpack.c.b16 %v869, %v865
        %v1270 = vpack.c.b16 %v874, %v870
        %v1271 = vpack.c.b16 %v875, %v871
        %v1272 = vpack.c.b16 %v876, %v872
        %v1273 = vpack.c.b16 %v877, %v873
        %v1274 = vpack.c.b16 %v882, %v878
        %v1275 = vpack.c.b16 %v883, %v879
        %v1276 = vpack.c.b16 %v884, %v880
        %v1277 = vpack.c.b16 %v885, %v881
        %v1278 = vpack.c.b16 %v890, %v886
        %v1279 = vpack.c.b16 %v891, %v887
        %v1280 = vpack.c.b16 %v892, %v888
        %v1281 = vpack.c.b16 %v893, %v889
        %v1282 = vpack.c.b16 %v898, %v894
        %v1283 = vpack.c.b16 %v899, %v895
        %v1284 = vpack.c.b16 %v900, %v896
        %v1285 = vpack.c.b16 %v901, %v897
        %v1286 = vpack.c.b16 %v906, %v902
        %v1287 = vpack.c.b16 %v907, %v903
        %v1288 = vpack.c.b16 %v908, %v904
        %v1289 = vpack.c.b16 %v909, %v905
        %v1290 = vpack.c.b16 %v914, %v910
        %v1291 = vpack.c.b16 %v915, %v911
        %v1292 = vpack.c.b16 %v916, %v912
        %v1293 = vpack.c.b16 %v917, %v913
        %v1294 = vpack.c.b16 %v922, %v918
        %v1295 = vpack.c.b16 %v923, %v919
        %v1296 = vpack.c.b16 %v924, %v920
        %v1297 = vpack.c.b16 %v925, %v921
        %v1298 = vpack.c.b16 %v930, %v926
        %v1299 = vpack.c.b16 %v931, %v927
        %v1300 = vpack.c.b16 %v932, %v928
        %v1301 = vpack.c.b16 %v933, %v929
        %v1302 = vpack.c.b16 %v938, %v934
        %v1303 = vpack.c.b16 %v939, %v935
        %v1304 = vpack.c.b16 %v940, %v936
        %v1305 = vpack.c.b16 %v941, %v937
        %v1306 = vpack.c.b16 %v946, %v942
        %v1307 = vpack.c.b16 %v947, %v943
        %v1308 = vpack.c.b16 %v948, %v944
        %v1309 = vpack.c.b16 %v949, %v945
        %v1310 = vpack.c.b16 %v954, %v950
        %v1311 = vpack.c.b16 %v955, %v951
        %v1312 = vpack.c.b16 %v956, %v952
        %v1313 = vpack.c.b16 %v957, %v953
        %v1314 = vpack.c.b16 %v962, %v958
        %v1315 = vpack.c.b16 %v963, %v959
        %v1316 = vpack.c.b16 %v964, %v960
        %v1317 = vpack.c.b16 %v965, %v961
        %v1318 = vpack.c.b16 %v970, %v966
        %v1319 = vpack.c.b16 %v971, %v967
        %v1320 = vpack.c.b16 %v972, %v968
        %v1321 = vpack.c.b16 %v973, %v969
        %v1322 = vpack.c.b16 %v978, %v974
        %v1323 = vpack.c.b16 %v979, %v975
        %v1324 = vpack.c.b16 %v980, %v976
        %v1325 = vpack.c.b16 %v981, %v977
        %v1326 = vpack.c.b16 %v986, %v982
        %v1327 = vpack.c.b16 %v987, %v983
        %v1328 = vpack.c.b16 %v988, %v984
        %v1329 = vpack.c.b16 %v989, %v985
        %v1330 = vpack.c.b16 %v994, %v990
        %v1331 = vpack.c.b16 %v995, %v991
        %v1332 = vpack.c.b16 %v996, %v992
        %v1333 = vpack.c.b16 %v997, %v993
        %v1334 = vpack.c.b16 %v1002, %v998
        %v1335 = vpack.c.b16 %v1003, %v999
        %v1336 = vpack.c.b16 %v1004, %v1000
        %v1337 = vpack.c.b16 %v1005, %v1001
        %v1338 = vpack.c.b16 %v1010, %v1006
        %v1339 = vpack.c.b16 %v1011, %v1007
        %v1340 = vpack.c.b16 %v1012, %v1008
        %v1341 = vpack.c.b16 %v1013, %v1009
        %v1342 = vpack.c.b16 %v1018, %v1014
        %v1343 = vpack.c.b16 %v1019, %v1015
        %v1344 = vpack.c.b16 %v1020, %v1016
        %v1345 = vpack.c.b16 %v1021, %v1017
        %v1346 = vpack.c.b16 %v1026, %v1022
        %v1347 = vpack.c.b16 %v1027, %v1023
        %v1348 = vpack.c.b16 %v1028, %v1024
        %v1349 = vpack.c.b16 %v1029, %v1025
        %v1350 = vpack.c.b16 %v1034, %v1030
        %v1351 = vpack.c.b16 %v1035, %v1031
        %v1352 = vpack.c.b16 %v1036, %v1032
        %v1353 = vpack.c.b16 %v1037, %v1033
        %v1354 = vpack.c.b16 %v1042, %v1038
        %v1355 = vpack.c.b16 %v1043, %v1039
        %v1356 = vpack.c.b16 %v1044, %v1040
        %v1357 = vpack.c.b16 %v1045, %v1041
        %v1358 = vpack.c.b16 %v1050, %v1046
        %v1359 = vpack.c.b16 %v1051, %v1047
        %v1360 = vpack.c.b16 %v1052, %v1048
        %v1361 = vpack.c.b16 %v1053, %v1049
        %v1362 = vpack.c.b16 %v1058, %v1054
        %v1363 = vpack.c.b16 %v1059, %v1055
        %v1364 = vpack.c.b16 %v1060, %v1056
        %v1365 = vpack.c.b16 %v1061, %v1057
        %v1366 = vpack.c.b16 %v1066, %v1062
        %v1367 = vpack.c.b16 %v1067, %v1063
        %v1368 = vpack.c.b16 %v1068, %v1064
        %v1369 = vpack.c.b16 %v1069, %v1065
        %v1370 = vpack.c.b16 %v1074, %v1070
        %v1371 = vpack.c.b16 %v1075, %v1071
        %v1372 = vpack.c.b16 %v1076, %v1072
        %v1373 = vpack.c.b16 %v1077, %v1073
        %v1374 = vpack.c.b16 %v1082, %v1078
        %v1375 = vpack.c.b16 %v1083, %v1079
        %v1376 = vpack.c.b16 %v1084, %v1080
        %v1377 = vpack.c.b16 %v1085, %v1081
        %v1378 = vpack.c.b16 %v1090, %v1086
        %v1379 = vpack.c.b16 %v1091, %v1087
        %v1380 = vpack.c.b16 %v1092, %v1088
        %v1381 = vpack.c.b16 %v1093, %v1089
        %v1382 = vpack.c.b16 %v1098, %v1094
        %v1383 = vpack.c.b16 %v1099, %v1095
        %v1384 = vpack.c.b16 %v1100, %v1096
        %v1385 = vpack.c.b16 %v1101, %v1097
        %v1386 = vpack.c.b16 %v1106, %v1102
        %v1387 = vpack.c.b16 %v1107, %v1103
        %v1388 = vpack.c.b16 %v1108, %v1104
        %v1389 = vpack.c.b16 %v1109, %v1105
        %v1390 = vpack.c.b16 %v1114, %v1110
        %v1391 = vpack.c.b16 %v1115, %v1111
        %v1392 = vpack.c.b16 %v1116, %v1112
        %v1393 = vpack.c.b16 %v1117, %v1113
        %v1394 = vpack.c.b16 %v1122, %v1118
        %v1395 = vpack.c.b16 %v1123, %v1119
        %v1396 = vpack.c.b16 %v1124, %v1120
        %v1397 = vpack.c.b16 %v1125, %v1121
        %v1398 = vpack.c.b16 %v1130, %v1126
        %v1399 = vpack.c.b16 %v1131, %v1127
        %v1400 = vpack.c.b16 %v1132, %v1128
        %v1401 = vpack.c.b16 %v1133, %v1129
        %v1402 = vpack.c.b16 %v1138, %v1134
        %v1403 = vpack.c.b16 %v1139, %v1135
        %v1404 = vpack.c.b16 %v1140, %v1136
        %v1405 = vpack.c.b16 %v1141, %v1137
        %v1406 = vpack.c.b16 %v1146, %v1142
        %v1407 = vpack.c.b16 %v1147, %v1143
        %v1408 = vpack.c.b16 %v1148, %v1144
        %v1409 = vpack.c.b16 %v1149, %v1145
        %v1410 = vpack.c.b16 %v1154, %v1150
        %v1411 = vpack.c.b16 %v1155, %v1151
        %v1412 = vpack.c.b16 %v1156, %v1152
        %v1413 = vpack.c.b16 %v1157, %v1153
        %v1414 = vpack.c.b16 %v1162, %v1158
        %v1415 = vpack.c.b16 %v1163, %v1159
        %v1416 = vpack.c.b16 %v1164, %v1160
        %v1417 = vpack.c.b16 %v1165, %v1161
        %v1418 = vpack.c.b16 %v1170, %v1166
        %v1419 = vpack.c.b16 %v1171, %v1167
        %v1420 = vpack.c.b16 %v1172, %v1168
        %v1421 = vpack.c.b16 %v1173, %v1169
        %v1422 = vpack.c.b16 %v1178, %v1174
        %v1423 = vpack.c.b16 %v1179, %v1175
        %v1424 = vpack.c.b16 %v1180, %v1176
        %v1425 = vpack.c.b16 %v1181, %v1177
        %v1426 = vpack.c.b16 %v1186, %v1182
        %v1427 = vpack.c.b16 %v1187, %v1183
        %v1428 = vpack.c.b16 %v1188, %v1184
        %v1429 = vpack.c.b16 %v1189, %v1185
        %v1430 = vpack.c.b16 %v1194, %v1190
        %v1431 = vpack.c.b16 %v1195, %v1191
        %v1432 = vpack.c.b16 %v1196, %v1192
        %v1433 = vpack.c.b16 %v1197, %v1193
        %v1434 = vpack.c.b16 %v1202, %v1198
        %v1435 = vpack.c.b16 %v1203, %v1199
        %v1436 = vpack.c.b16 %v1204, %v1200
        %v1437 = vpack.c.b16 %v1205, %v1201
        %v1438 = vpack.c.b16 %v1210, %v1206
        %v1439 = vpack.c.b16 %v1211, %v1207
        %v1440 = vpack.c.b16 %v1212, %v1208
        %v1441 = vpack.c.b16 %v1213, %v1209
        %v1442 = vpack.c.b16 %v1218, %v1214
        %v1443 = vpack.c.b16 %v1219, %v1215
        %v1444 = vpack.c.b16 %v1220, %v1216
        %v1445 = vpack.c.b16 %v1221, %v1217
        %1670 = vmatpush.bf16.msra.mxu0 %v1250
        %1671 = vmatpush.bf16.msra.mxu0 %v1246
        %1672 = vmatpush.bf16.msra.mxu0 %v1242
        %1673 = vmatpush.bf16.msra.mxu0 %v1238
        %1674 = vmatpush.bf16.msra.mxu0 %v1234
        %1675 = vmatpush.bf16.msra.mxu0 %v1230
        %1676 = vmatpush.bf16.msra.mxu0 %v1226
        %1677 = vmatpush.bf16.msra.mxu0 %v1222
        %1678 = vmatmul.bf16.gmra.mxu0 %v536
        %v1679 = vpop.f32.mrf.mxu0
        %v1680 = vadd.f32 %v506, %v1679
        %v1681 = vpop.f32.mrf.mxu0
        %v1682 = vadd.f32 %v506, %v1681
        %1683 = vdwg.mxu0
        %1684 = vmatpush.bf16.msra.mxu0 %v1282
        %1685 = vmatpush.bf16.msra.mxu0 %v1278
        %1686 = vmatpush.bf16.msra.mxu0 %v1274
        %1687 = vmatpush.bf16.msra.mxu0 %v1270
        %1688 = vmatpush.bf16.msra.mxu0 %v1266
        %1689 = vmatpush.bf16.msra.mxu0 %v1262
        %1690 = vmatpush.bf16.msra.mxu0 %v1258
        %1691 = vmatpush.bf16.msra.mxu0 %v1254
        %1692 = vmatmul.bf16.gmra.mxu0 %v537
        %v1693 = vpop.f32.mrf.mxu0
        %v1694 = vadd.f32 %v1680, %v1693
        %v1695 = vpop.f32.mrf.mxu0
        %v1696 = vadd.f32 %v1682, %v1695
        %1697 = vdwg.mxu0
        %1698 = vmatpush.bf16.msra.mxu0 %v1314
        %1699 = vmatpush.bf16.msra.mxu0 %v1310
        %1700 = vmatpush.bf16.msra.mxu0 %v1306
        %1701 = vmatpush.bf16.msra.mxu0 %v1302
        %1702 = vmatpush.bf16.msra.mxu0 %v1298
        %1703 = vmatpush.bf16.msra.mxu0 %v1294
        %1704 = vmatpush.bf16.msra.mxu0 %v1290
        %1705 = vmatpush.bf16.msra.mxu0 %v1286
        %1706 = vmatmul.bf16.gmra.mxu0 %v538
        %v1707 = vpop.f32.mrf.mxu0
        %v1708 = vadd.f32 %v1694, %v1707
        %v1709 = vpop.f32.mrf.mxu0
        %v1710 = vadd.f32 %v1696, %v1709
        %1711 = vdwg.mxu0
        %1712 = vmatpush.bf16.msra.mxu0 %v1346
        %1713 = vmatpush.bf16.msra.mxu0 %v1342
        %1714 = vmatpush.bf16.msra.mxu0 %v1338
        %1715 = vmatpush.bf16.msra.mxu0 %v1334
        %1716 = vmatpush.bf16.msra.mxu0 %v1330
        %1717 = vmatpush.bf16.msra.mxu0 %v1326
        %1718 = vmatpush.bf16.msra.mxu0 %v1322
        %1719 = vmatpush.bf16.msra.mxu0 %v1318
        %1720 = vmatmul.bf16.gmra.mxu0 %v539
        %v1721 = vpop.f32.mrf.mxu0
        %v1722 = vadd.f32 %v1708, %v1721
        %v1723 = vpop.f32.mrf.mxu0
        %v1724 = vadd.f32 %v1710, %v1723
        %1725 = vdwg.mxu0
        %1726 = vmatpush.bf16.msra.mxu0 %v1378
        %1727 = vmatpush.bf16.msra.mxu0 %v1374
        %1728 = vmatpush.bf16.msra.mxu0 %v1370
        %1729 = vmatpush.bf16.msra.mxu0 %v1366
        %1730 = vmatpush.bf16.msra.mxu0 %v1362
        %1731 = vmatpush.bf16.msra.mxu0 %v1358
        %1732 = vmatpush.bf16.msra.mxu0 %v1354
        %1733 = vmatpush.bf16.msra.mxu0 %v1350
        %1734 = vmatmul.bf16.gmra.mxu0 %v540
        %v1735 = vpop.f32.mrf.mxu0
        %v1736 = vadd.f32 %v1722, %v1735
        %v1737 = vpop.f32.mrf.mxu0
        %v1738 = vadd.f32 %v1724, %v1737
        %1739 = vdwg.mxu0
        %1740 = vmatpush.bf16.msra.mxu0 %v1410
        %1741 = vmatpush.bf16.msra.mxu0 %v1406
        %1742 = vmatpush.bf16.msra.mxu0 %v1402
        %1743 = vmatpush.bf16.msra.mxu0 %v1398
        %1744 = vmatpush.bf16.msra.mxu0 %v1394
        %1745 = vmatpush.bf16.msra.mxu0 %v1390
        %1746 = vmatpush.bf16.msra.mxu0 %v1386
        %1747 = vmatpush.bf16.msra.mxu0 %v1382
        %1748 = vmatmul.bf16.gmra.mxu0 %v541
        %v1749 = vpop.f32.mrf.mxu0
        %v1750 = vadd.f32 %v1736, %v1749
        %v1751 = vpop.f32.mrf.mxu0
        %v1752 = vadd.f32 %v1738, %v1751
        %1753 = vdwg.mxu0
        %1754 = vmatpush.bf16.msra.mxu0 %v1442
        %1755 = vmatpush.bf16.msra.mxu0 %v1438
        %1756 = vmatpush.bf16.msra.mxu0 %v1434
        %1757 = vmatpush.bf16.msra.mxu0 %v1430
        %1758 = vmatpush.bf16.msra.mxu0 %v1426
        %1759 = vmatpush.bf16.msra.mxu0 %v1422
        %1760 = vmatpush.bf16.msra.mxu0 %v1418
        %1761 = vmatpush.bf16.msra.mxu0 %v1414
        %1762 = vmatmul.bf16.gmra.mxu0 %v542
        %v1763 = vpop.f32.mrf.mxu0
        %v1764 = vadd.f32 %v1750, %v1763
        %v1765 = vpop.f32.mrf.mxu0
        %v1766 = vadd.f32 %v1752, %v1765
        %1767 = vdwg.mxu0
        %1768 = vmatpush.bf16.msra.mxu0 %v1251
        %1769 = vmatpush.bf16.msra.mxu0 %v1247
        %1770 = vmatpush.bf16.msra.mxu0 %v1243
        %1771 = vmatpush.bf16.msra.mxu0 %v1239
        %1772 = vmatpush.bf16.msra.mxu0 %v1235
        %1773 = vmatpush.bf16.msra.mxu0 %v1231
        %1774 = vmatpush.bf16.msra.mxu0 %v1227
        %1775 = vmatpush.bf16.msra.mxu0 %v1223
        %1776 = vmatmul.bf16.gmra.mxu0 %v536
        %v1777 = vpop.f32.mrf.mxu0
        %v1778 = vadd.f32 %v507, %v1777
        %v1779 = vpop.f32.mrf.mxu0
        %v1780 = vadd.f32 %v507, %v1779
        %1781 = vdwg.mxu0
        %1782 = vmatpush.bf16.msra.mxu0 %v1283
        %1783 = vmatpush.bf16.msra.mxu0 %v1279
        %1784 = vmatpush.bf16.msra.mxu0 %v1275
        %1785 = vmatpush.bf16.msra.mxu0 %v1271
        %1786 = vmatpush.bf16.msra.mxu0 %v1267
        %1787 = vmatpush.bf16.msra.mxu0 %v1263
        %1788 = vmatpush.bf16.msra.mxu0 %v1259
        %1789 = vmatpush.bf16.msra.mxu0 %v1255
        %1790 = vmatmul.bf16.gmra.mxu0 %v537
        %v1791 = vpop.f32.mrf.mxu0
        %v1792 = vadd.f32 %v1778, %v1791
        %v1793 = vpop.f32.mrf.mxu0
        %v1794 = vadd.f32 %v1780, %v1793
        %1795 = vdwg.mxu0
        %1796 = vmatpush.bf16.msra.mxu0 %v1315
        %1797 = vmatpush.bf16.msra.mxu0 %v1311
        %1798 = vmatpush.bf16.msra.mxu0 %v1307
        %1799 = vmatpush.bf16.msra.mxu0 %v1303
        %1800 = vmatpush.bf16.msra.mxu0 %v1299
        %1801 = vmatpush.bf16.msra.mxu0 %v1295
        %1802 = vmatpush.bf16.msra.mxu0 %v1291
        %1803 = vmatpush.bf16.msra.mxu0 %v1287
        %1804 = vmatmul.bf16.gmra.mxu0 %v538
        %v1805 = vpop.f32.mrf.mxu0
        %v1806 = vadd.f32 %v1792, %v1805
        %v1807 = vpop.f32.mrf.mxu0
        %v1808 = vadd.f32 %v1794, %v1807
        %1809 = vdwg.mxu0
        %1810 = vmatpush.bf16.msra.mxu0 %v1347
        %1811 = vmatpush.bf16.msra.mxu0 %v1343
        %1812 = vmatpush.bf16.msra.mxu0 %v1339
        %1813 = vmatpush.bf16.msra.mxu0 %v1335
        %1814 = vmatpush.bf16.msra.mxu0 %v1331
        %1815 = vmatpush.bf16.msra.mxu0 %v1327
        %1816 = vmatpush.bf16.msra.mxu0 %v1323
        %1817 = vmatpush.bf16.msra.mxu0 %v1319
        %1818 = vmatmul.bf16.gmra.mxu0 %v539
        %v1819 = vpop.f32.mrf.mxu0
        %v1820 = vadd.f32 %v1806, %v1819
        %v1821 = vpop.f32.mrf.mxu0
        %v1822 = vadd.f32 %v1808, %v1821
        %1823 = vdwg.mxu0
        %1824 = vmatpush.bf16.msra.mxu0 %v1379
        %1825 = vmatpush.bf16.msra.mxu0 %v1375
        %1826 = vmatpush.bf16.msra.mxu0 %v1371
        %1827 = vmatpush.bf16.msra.mxu0 %v1367
        %1828 = vmatpush.bf16.msra.mxu0 %v1363
        %1829 = vmatpush.bf16.msra.mxu0 %v1359
        %1830 = vmatpush.bf16.msra.mxu0 %v1355
        %1831 = vmatpush.bf16.msra.mxu0 %v1351
        %1832 = vmatmul.bf16.gmra.mxu0 %v540
        %v1833 = vpop.f32.mrf.mxu0
        %v1834 = vadd.f32 %v1820, %v1833
        %v1835 = vpop.f32.mrf.mxu0
        %v1836 = vadd.f32 %v1822, %v1835
        %1837 = vdwg.mxu0
        %1838 = vmatpush.bf16.msra.mxu0 %v1411
        %1839 = vmatpush.bf16.msra.mxu0 %v1407
        %1840 = vmatpush.bf16.msra.mxu0 %v1403
        %1841 = vmatpush.bf16.msra.mxu0 %v1399
        %1842 = vmatpush.bf16.msra.mxu0 %v1395
        %1843 = vmatpush.bf16.msra.mxu0 %v1391
        %1844 = vmatpush.bf16.msra.mxu0 %v1387
        %1845 = vmatpush.bf16.msra.mxu0 %v1383
        %1846 = vmatmul.bf16.gmra.mxu0 %v541
        %v1847 = vpop.f32.mrf.mxu0
        %v1848 = vadd.f32 %v1834, %v1847
        %v1849 = vpop.f32.mrf.mxu0
        %v1850 = vadd.f32 %v1836, %v1849
        %1851 = vdwg.mxu0
        %1852 = vmatpush.bf16.msra.mxu0 %v1443
        %1853 = vmatpush.bf16.msra.mxu0 %v1439
        %1854 = vmatpush.bf16.msra.mxu0 %v1435
        %1855 = vmatpush.bf16.msra.mxu0 %v1431
        %1856 = vmatpush.bf16.msra.mxu0 %v1427
        %1857 = vmatpush.bf16.msra.mxu0 %v1423
        %1858 = vmatpush.bf16.msra.mxu0 %v1419
        %1859 = vmatpush.bf16.msra.mxu0 %v1415
        %1860 = vmatmul.bf16.gmra.mxu0 %v542
        %v1861 = vpop.f32.mrf.mxu0
        %v1862 = vadd.f32 %v1848, %v1861
        %v1863 = vpop.f32.mrf.mxu0
        %v1864 = vadd.f32 %v1850, %v1863
        %1865 = vdwg.mxu0
        %1866 = vmatpush.bf16.msra.mxu0 %v1252
        %1867 = vmatpush.bf16.msra.mxu0 %v1248
        %1868 = vmatpush.bf16.msra.mxu0 %v1244
        %1869 = vmatpush.bf16.msra.mxu0 %v1240
        %1870 = vmatpush.bf16.msra.mxu0 %v1236
        %1871 = vmatpush.bf16.msra.mxu0 %v1232
        %1872 = vmatpush.bf16.msra.mxu0 %v1228
        %1873 = vmatpush.bf16.msra.mxu0 %v1224
        %1874 = vmatmul.bf16.gmra.mxu0 %v536
        %v1875 = vpop.f32.mrf.mxu0
        %v1876 = vadd.f32 %v508, %v1875
        %v1877 = vpop.f32.mrf.mxu0
        %v1878 = vadd.f32 %v508, %v1877
        %1879 = vdwg.mxu0
        %1880 = vmatpush.bf16.msra.mxu0 %v1284
        %1881 = vmatpush.bf16.msra.mxu0 %v1280
        %1882 = vmatpush.bf16.msra.mxu0 %v1276
        %1883 = vmatpush.bf16.msra.mxu0 %v1272
        %1884 = vmatpush.bf16.msra.mxu0 %v1268
        %1885 = vmatpush.bf16.msra.mxu0 %v1264
        %1886 = vmatpush.bf16.msra.mxu0 %v1260
        %1887 = vmatpush.bf16.msra.mxu0 %v1256
        %1888 = vmatmul.bf16.gmra.mxu0 %v537
        %v1889 = vpop.f32.mrf.mxu0
        %v1890 = vadd.f32 %v1876, %v1889
        %v1891 = vpop.f32.mrf.mxu0
        %v1892 = vadd.f32 %v1878, %v1891
        %1893 = vdwg.mxu0
        %1894 = vmatpush.bf16.msra.mxu0 %v1316
        %1895 = vmatpush.bf16.msra.mxu0 %v1312
        %1896 = vmatpush.bf16.msra.mxu0 %v1308
        %1897 = vmatpush.bf16.msra.mxu0 %v1304
        %1898 = vmatpush.bf16.msra.mxu0 %v1300
        %1899 = vmatpush.bf16.msra.mxu0 %v1296
        %1900 = vmatpush.bf16.msra.mxu0 %v1292
        %1901 = vmatpush.bf16.msra.mxu0 %v1288
        %1902 = vmatmul.bf16.gmra.mxu0 %v538
        %v1903 = vpop.f32.mrf.mxu0
        %v1904 = vadd.f32 %v1890, %v1903
        %v1905 = vpop.f32.mrf.mxu0
        %v1906 = vadd.f32 %v1892, %v1905
        %1907 = vdwg.mxu0
        %1908 = vmatpush.bf16.msra.mxu0 %v1348
        %1909 = vmatpush.bf16.msra.mxu0 %v1344
        %1910 = vmatpush.bf16.msra.mxu0 %v1340
        %1911 = vmatpush.bf16.msra.mxu0 %v1336
        %1912 = vmatpush.bf16.msra.mxu0 %v1332
        %1913 = vmatpush.bf16.msra.mxu0 %v1328
        %1914 = vmatpush.bf16.msra.mxu0 %v1324
        %1915 = vmatpush.bf16.msra.mxu0 %v1320
        %1916 = vmatmul.bf16.gmra.mxu0 %v539
        %v1917 = vpop.f32.mrf.mxu0
        %v1918 = vadd.f32 %v1904, %v1917
        %v1919 = vpop.f32.mrf.mxu0
        %v1920 = vadd.f32 %v1906, %v1919
        %1921 = vdwg.mxu0
        %1922 = vmatpush.bf16.msra.mxu0 %v1380
        %1923 = vmatpush.bf16.msra.mxu0 %v1376
        %1924 = vmatpush.bf16.msra.mxu0 %v1372
        %1925 = vmatpush.bf16.msra.mxu0 %v1368
        %1926 = vmatpush.bf16.msra.mxu0 %v1364
        %1927 = vmatpush.bf16.msra.mxu0 %v1360
        %1928 = vmatpush.bf16.msra.mxu0 %v1356
        %1929 = vmatpush.bf16.msra.mxu0 %v1352
        %1930 = vmatmul.bf16.gmra.mxu0 %v540
        %v1931 = vpop.f32.mrf.mxu0
        %v1932 = vadd.f32 %v1918, %v1931
        %v1933 = vpop.f32.mrf.mxu0
        %v1934 = vadd.f32 %v1920, %v1933
        %1935 = vdwg.mxu0
        %1936 = vmatpush.bf16.msra.mxu0 %v1412
        %1937 = vmatpush.bf16.msra.mxu0 %v1408
        %1938 = vmatpush.bf16.msra.mxu0 %v1404
        %1939 = vmatpush.bf16.msra.mxu0 %v1400
        %1940 = vmatpush.bf16.msra.mxu0 %v1396
        %1941 = vmatpush.bf16.msra.mxu0 %v1392
        %1942 = vmatpush.bf16.msra.mxu0 %v1388
        %1943 = vmatpush.bf16.msra.mxu0 %v1384
        %1944 = vmatmul.bf16.gmra.mxu0 %v541
        %v1945 = vpop.f32.mrf.mxu0
        %v1946 = vadd.f32 %v1932, %v1945
        %v1947 = vpop.f32.mrf.mxu0
        %v1948 = vadd.f32 %v1934, %v1947
        %1949 = vdwg.mxu0
        %1950 = vmatpush.bf16.msra.mxu0 %v1444
        %1951 = vmatpush.bf16.msra.mxu0 %v1440
        %1952 = vmatpush.bf16.msra.mxu0 %v1436
        %1953 = vmatpush.bf16.msra.mxu0 %v1432
        %1954 = vmatpush.bf16.msra.mxu0 %v1428
        %1955 = vmatpush.bf16.msra.mxu0 %v1424
        %1956 = vmatpush.bf16.msra.mxu0 %v1420
        %1957 = vmatpush.bf16.msra.mxu0 %v1416
        %1958 = vmatmul.bf16.gmra.mxu0 %v542
        %v1959 = vpop.f32.mrf.mxu0
        %v1960 = vadd.f32 %v1946, %v1959
        %v1961 = vpop.f32.mrf.mxu0
        %v1962 = vadd.f32 %v1948, %v1961
        %1963 = vdwg.mxu0
        %1964 = vmatpush.bf16.msra.mxu0 %v1253
        %1965 = vmatpush.bf16.msra.mxu0 %v1249
        %1966 = vmatpush.bf16.msra.mxu0 %v1245
        %1967 = vmatpush.bf16.msra.mxu0 %v1241
        %1968 = vmatpush.bf16.msra.mxu0 %v1237
        %1969 = vmatpush.bf16.msra.mxu0 %v1233
        %1970 = vmatpush.bf16.msra.mxu0 %v1229
        %1971 = vmatpush.bf16.msra.mxu0 %v1225
        %1972 = vmatmul.bf16.gmra.mxu0 %v536
        %v1973 = vpop.f32.mrf.mxu0
        %v1974 = vadd.f32 %v509, %v1973
        %v1975 = vpop.f32.mrf.mxu0
        %v1976 = vadd.f32 %v509, %v1975
        %1977 = vdwg.mxu0
        %1978 = vmatpush.bf16.msra.mxu0 %v1285
        %1979 = vmatpush.bf16.msra.mxu0 %v1281
        %1980 = vmatpush.bf16.msra.mxu0 %v1277
        %1981 = vmatpush.bf16.msra.mxu0 %v1273
        %1982 = vmatpush.bf16.msra.mxu0 %v1269
        %1983 = vmatpush.bf16.msra.mxu0 %v1265
        %1984 = vmatpush.bf16.msra.mxu0 %v1261
        %1985 = vmatpush.bf16.msra.mxu0 %v1257
        %1986 = vmatmul.bf16.gmra.mxu0 %v537
        %v1987 = vpop.f32.mrf.mxu0
        %v1988 = vadd.f32 %v1974, %v1987
        %v1989 = vpop.f32.mrf.mxu0
        %v1990 = vadd.f32 %v1976, %v1989
        %1991 = vdwg.mxu0
        %1992 = vmatpush.bf16.msra.mxu0 %v1317
        %1993 = vmatpush.bf16.msra.mxu0 %v1313
        %1994 = vmatpush.bf16.msra.mxu0 %v1309
        %1995 = vmatpush.bf16.msra.mxu0 %v1305
        %1996 = vmatpush.bf16.msra.mxu0 %v1301
        %1997 = vmatpush.bf16.msra.mxu0 %v1297
        %1998 = vmatpush.bf16.msra.mxu0 %v1293
        %1999 = vmatpush.bf16.msra.mxu0 %v1289
        %2000 = vmatmul.bf16.gmra.mxu0 %v538
        %v2001 = vpop.f32.mrf.mxu0
        %v2002 = vadd.f32 %v1988, %v2001
        %v2003 = vpop.f32.mrf.mxu0
        %v2004 = vadd.f32 %v1990, %v2003
        %2005 = vdwg.mxu0
        %2006 = vmatpush.bf16.msra.mxu0 %v1349
        %2007 = vmatpush.bf16.msra.mxu0 %v1345
        %2008 = vmatpush.bf16.msra.mxu0 %v1341
        %2009 = vmatpush.bf16.msra.mxu0 %v1337
        %2010 = vmatpush.bf16.msra.mxu0 %v1333
        %2011 = vmatpush.bf16.msra.mxu0 %v1329
        %2012 = vmatpush.bf16.msra.mxu0 %v1325
        %2013 = vmatpush.bf16.msra.mxu0 %v1321
        %2014 = vmatmul.bf16.gmra.mxu0 %v539
        %v2015 = vpop.f32.mrf.mxu0
        %v2016 = vadd.f32 %v2002, %v2015
        %v2017 = vpop.f32.mrf.mxu0
        %v2018 = vadd.f32 %v2004, %v2017
        %2019 = vdwg.mxu0
        %2020 = vmatpush.bf16.msra.mxu0 %v1381
        %2021 = vmatpush.bf16.msra.mxu0 %v1377
        %2022 = vmatpush.bf16.msra.mxu0 %v1373
        %2023 = vmatpush.bf16.msra.mxu0 %v1369
        %2024 = vmatpush.bf16.msra.mxu0 %v1365
        %2025 = vmatpush.bf16.msra.mxu0 %v1361
        %2026 = vmatpush.bf16.msra.mxu0 %v1357
        %2027 = vmatpush.bf16.msra.mxu0 %v1353
        %2028 = vmatmul.bf16.gmra.mxu0 %v540
        %v2029 = vpop.f32.mrf.mxu0
        %v2030 = vadd.f32 %v2016, %v2029
        %v2031 = vpop.f32.mrf.mxu0
        %v2032 = vadd.f32 %v2018, %v2031
        %2033 = vdwg.mxu0
        %2034 = vmatpush.bf16.msra.mxu0 %v1413
        %2035 = vmatpush.bf16.msra.mxu0 %v1409
        %2036 = vmatpush.bf16.msra.mxu0 %v1405
        %2037 = vmatpush.bf16.msra.mxu0 %v1401
        %2038 = vmatpush.bf16.msra.mxu0 %v1397
        %2039 = vmatpush.bf16.msra.mxu0 %v1393
        %2040 = vmatpush.bf16.msra.mxu0 %v1389
        %2041 = vmatpush.bf16.msra.mxu0 %v1385
        %2042 = vmatmul.bf16.gmra.mxu0 %v541
        %v2043 = vpop.f32.mrf.mxu0
        %v2044 = vadd.f32 %v2030, %v2043
        %v2045 = vpop.f32.mrf.mxu0
        %v2046 = vadd.f32 %v2032, %v2045
        %2047 = vdwg.mxu0
        %2048 = vmatpush.bf16.msra.mxu0 %v1445
        %2049 = vmatpush.bf16.msra.mxu0 %v1441
        %2050 = vmatpush.bf16.msra.mxu0 %v1437
        %2051 = vmatpush.bf16.msra.mxu0 %v1433
        %2052 = vmatpush.bf16.msra.mxu0 %v1429
        %2053 = vmatpush.bf16.msra.mxu0 %v1425
        %2054 = vmatpush.bf16.msra.mxu0 %v1421
        %2055 = vmatpush.bf16.msra.mxu0 %v1417
        %2056 = vmatmul.bf16.gmra.mxu0 %v542
        %v2057 = vpop.f32.mrf.mxu0
        %v2058 = vadd.f32 %v2044, %v2057
        %v2059 = vpop.f32.mrf.mxu0
        %v2060 = vadd.f32 %v2046, %v2059
        %2061 = vdwg.mxu0
        %2062 = vst [vmem:[%s266] sm:$0xff] %v1764
        %2063 = vst [vmem:[%s266 + $0x8] sm:$0xff] %v1862
        %2064 = vst [vmem:[%s266 + $0x10] sm:$0xff] %v1960
        %2065 = vst [vmem:[%s266 + $0x18] sm:$0xff] %v2058
        %2066 = vst [vmem:[%s266 + $0x20] sm:$0xff] %v1766
        %2067 = vst [vmem:[%s266 + $0x28] sm:$0xff] %v1864
        %2068 = vst [vmem:[%s266 + $0x30] sm:$0xff] %v1962
        %2069 = vst [vmem:[%s266 + $0x38] sm:$0xff] %v2060
        %s2070 = sand.u32 %s121, 1
        %s2071 = scalar_lea.sflag [#allocation4], %s2070
        %s2072 = sand.u32 %s121, 1
        %s2073 = smul.addr %s2072, 64
        %s2074 = scalar_lea.vmem [#allocation8], %s2073
        // Predicated region
        $region45: #{tpu_custom_call.1} parent=31 // pred_check
          %p2075 = pneg %p131
        $region46: #{tpu_custom_call.1} parent=31 // pred_check_branch
          %2077 = sbr.rel (%p2075) target = $region48
        $region47: #{tpu_custom_call.1} parent=31 // pred_region
          %s2078 = smul.u32 2, %s25
          %s2079 = smul.u32 4, %s26
          %2081 = vsyncadd %s2071, 0
          %s2082 = smul.addr %s2078, 8
          %s2083 = sadd.s32 %s2079, %s2082
          %s2084 = smul.addr %s2083, 8
          %s2085 = scalar_lea.hbm %s3, %s2084
          %s2086 = sshll.u32 %s2074, 4
          %s2087 = int_to_ptr.vmem [resolvable:$true] %s2086
          %s2088 = sshll.u32 %s2085, 4
          %s2089 = int_to_ptr.hbm [resolvable:$true] %s2088
          %2094 = dma.vmem_to_hbm [thread:$0]  %s2087, 1024, %s2089, %s2071, 512, 1024, 32
        $region48: #{tpu_custom_call.1} parent=31 // pred_fallthru
          _
      $region32: #{tpu_custom_call.1} parent=5 // pred_fallthru
        _
      %p2095 = scmp.le.s32.totalorder 2, %s16
      // Predicated region
      $region49: #{tpu_custom_call.1} parent=5 // pred_check
        %p2096 = pneg %p2095
      $region50: #{tpu_custom_call.1} parent=5 // pred_check_branch
        %2098 = sbr.rel (%p2096) target = $region52
      $region51: #{tpu_custom_call.1} parent=5 // pred_region
        %s2099 = ssub.s32 %s16, 2
        // Predicated region
        $region53: #{tpu_custom_call.1} parent=51 // pred_check
          %p2100 = pneg %p137
        $region54: #{tpu_custom_call.1} parent=51 // pred_check_branch
          %2102 = sbr.rel (%p2100) target = $region56
        $region55: #{tpu_custom_call.1} parent=51 // pred_region
          %s2103 = sand.u32 %s122, 1
          %s2104 = scalar_lea.sflag [#allocation4], %s2103
          %s2105 = sand.u32 %s122, 1
          %s2106 = smul.addr %s2105, 64
          %s2107 = scalar_lea.vmem [#allocation8], %s2106
          %2109 = dma.done %s2104, 1024
        $region56: #{tpu_custom_call.1} parent=51 // pred_fallthru
          _
      $region52: #{tpu_custom_call.1} parent=5 // pred_fallthru
        _
    $region6: #{tpu_custom_call.1} parent=1 // loop_footer
      %s20 = sadd.s32 1, %s16
    $region7: #{tpu_custom_call.1} parent=1 // loop_footer_branch
      %15 = sbr.rel target = $region3
    $region8: #{tpu_custom_call.1} parent=1 // loop_exit
      _
    %2110 = vsyncpa [#allocation3], 1
    %s2111 = scalar_lea.sflag [#allocation3], 1
    %2112 = vsyncpa %s2111, 1
    %2113 = vsyncpa [#allocation6], 1
    %s2114 = scalar_lea.sflag [#allocation6], 1
    %2115 = vsyncpa %s2114, 1
    %2116 = vsyncpa [#allocation4], 1
    %s2117 = scalar_lea.sflag [#allocation4], 1
    %2118 = vsyncpa %s2117, 1

</llo_original>
